<compile_context>
chip_gen: v5e
topology: v5e:2x2
jax: 0.10.0
libtpu: 0.0.40
codegen_flags: <defaults>
</compile_context>

<pallas_src>
import jax
import jax.numpy as jnp
from jax.experimental import pallas as pl
from jax.experimental.pallas import tpu as pltpu

IN_FEATURES = 50 * 4 * 4   # 800
HIDDEN = 512
OUT = 1
OUT_PAD = 128              # lane-dense padded fc2 output width


def _mine_kernel(x_ref, y_ref, w1x_ref, w1y_ref, b1_ref, w2_ref, b2_ref, o_ref):
    # bf16 activations x bf16 weights on the MXU, f32 accumulation.
    x_bf = x_ref[...].astype(jnp.bfloat16)
    y_bf = y_ref[...].astype(jnp.bfloat16)
    hx = jnp.dot(x_bf, w1x_ref[...], preferred_element_type=jnp.float32)
    hy = jnp.dot(y_bf, w1y_ref[...], preferred_element_type=jnp.float32)
    h = hx + hy + b1_ref[...]                      # single pre-summed fc1 bias
    h1 = jnp.where(h > 0, h, 0.01 * h)             # leaky_relu, slope 0.01
    out = jnp.dot(h1.astype(jnp.bfloat16), w2_ref[...],
                  preferred_element_type=jnp.float32) + b2_ref[...]
    o_ref[...] = out.astype(o_ref.dtype)           # [TM, 128] lane-dense store


def prepare_params(params):
    """One-time (off the hot path) conversion from nn.Linear layout to kernel layout."""
    w1x_t = params["w1x"].T.astype(jnp.bfloat16)                       # [800, 512]
    w1y_t = params["w1y"].T.astype(jnp.bfloat16)                       # [800, 512]
    b1 = (params["b1x"] + params["b1y"]).reshape(1, HIDDEN).astype(jnp.float32)
    w2_pad = jnp.zeros((HIDDEN, OUT_PAD), jnp.float32)
    w2_pad = w2_pad.at[:, :OUT].set(params["w2"].T).astype(jnp.bfloat16)  # [512, 128]
    b2_pad = jnp.zeros((1, OUT_PAD), jnp.float32)
    b2_pad = b2_pad.at[:, :OUT].set(params["b2"].reshape(1, OUT))         # [1, 128]
    return {"w1x_t": w1x_t, "w1y_t": w1y_t, "b1": b1,
            "w2_pad": w2_pad, "b2_pad": b2_pad}


def pacs_mine_forward(x, y, prep):
    """x, y: [B, 800] float32. prep: output of prepare_params. Returns [B, 1] f32."""
    B = x.shape[0]
    TM = B if B <= 512 else 512                   # batch tile; weights stay VMEM-resident
    nb = pl.cdiv(B, TM)

    flops = 4 * B * IN_FEATURES * HIDDEN + 2 * B * HIDDEN * OUT_PAD
    bytes_accessed = (
        2 * (prep["w1x_t"].size + prep["w1y_t"].size + prep["w2_pad"].size)  # bf16 weights
        + 4 * (x.size + y.size)                                              # f32 activations
        + 4 * (HIDDEN + OUT_PAD)                                             # biases
        + 4 * B * OUT_PAD                                                    # padded output
    )

    out_padded = pl.pallas_call(
        _mine_kernel,
        out_shape=jax.ShapeDtypeStruct((B, OUT_PAD), jnp.float32),
        grid=(nb,),
        in_specs=[
            pl.BlockSpec((TM, IN_FEATURES), lambda i: (i, 0)),       # x tile
            pl.BlockSpec((TM, IN_FEATURES), lambda i: (i, 0)),       # y tile
            pl.BlockSpec((IN_FEATURES, HIDDEN), lambda i: (0, 0)),   # w1x^T (resident)
            pl.BlockSpec((IN_FEATURES, HIDDEN), lambda i: (0, 0)),   # w1y^T (resident)
            pl.BlockSpec((1, HIDDEN), lambda i: (0, 0)),             # b1 = b1x + b1y
            pl.BlockSpec((HIDDEN, OUT_PAD), lambda i: (0, 0)),       # w2^T padded
            pl.BlockSpec((1, OUT_PAD), lambda i: (0, 0)),            # b2 padded
        ],
        out_specs=pl.BlockSpec((TM, OUT_PAD), lambda i: (i, 0)),
        compiler_params=pltpu.CompilerParams(
            dimension_semantics=("parallel",)),
        cost_estimate=pl.CostEstimate(
            flops=flops, transcendentals=0, bytes_accessed=bytes_accessed),
    )(x, y, prep["w1x_t"], prep["w1y_t"], prep["b1"], prep["w2_pad"], prep["b2_pad"])

    return out_padded[:, :OUT]                    # [B, 1]


def init_params(key):
    """Deterministic init mimicking nn.Linear defaults: U(-1/sqrt(fan_in), 1/sqrt(fan_in))."""
    ks = jax.random.split(key, 6)

    def lin(kw, kb, out_f, in_f):
        bound = 1.0 / jnp.sqrt(in_f)
        w = jax.random.uniform(kw, (out_f, in_f), jnp.float32, -bound, bound)
        b = jax.random.uniform(kb, (out_f,), jnp.float32, -bound, bound)
        return w, b

    w1x, b1x = lin(ks[0], ks[1], HIDDEN, IN_FEATURES)
    w1y, b1y = lin(ks[2], ks[3], HIDDEN, IN_FEATURES)
    w2, b2 = lin(ks[4], ks[5], OUT, HIDDEN)
    return {"w1x": w1x, "b1x": b1x, "w1y": w1y, "b1y": b1y, "w2": w2, "b2": b2}


def reference_forward(x, y, p):
    h = x @ p["w1x"].T + p["b1x"] + y @ p["w1y"].T + p["b1y"]
    h1 = jnp.where(h > 0, h, 0.01 * h)
    return h1 @ p["w2"].T + p["b2"]


if __name__ == "__main__":
    key = jax.random.PRNGKey(0)
    kp, kx, ky = jax.random.split(key, 3)

    B = 8  # small batch; feature dim (800) is fixed by the module
    params = init_params(kp)
    prep = prepare_params(params)   # one-time weight layout + bf16 cast, off hot path

    x = jax.random.normal(kx, (B, IN_FEATURES), jnp.float32)
    y = jax.random.normal(ky, (B, IN_FEATURES), jnp.float32)

    out = pacs_mine_forward(x, y, prep)
    out = jax.block_until_ready(out)

    ref = reference_forward(x, y, params)
    assert out.shape == (B, OUT)
    # Tolerance relaxed vs f32 reference because weights are stored in bf16.
    assert jnp.allclose(out, ref, atol=2e-2, rtol=2e-2), "mismatch vs reference"

    print("KERNEL_OK")
</pallas_src>

<mosaic_0001>
module attributes {stable_mosaic.version = 11 : i64} {
  func.func @_mine_kernel(%arg0: i32, %arg1: memref<8x800xf32, #tpu.memory_space<vmem>>, %arg2: memref<8x800xf32, #tpu.memory_space<vmem>>, %arg3: memref<800x512xbf16, #tpu.memory_space<vmem>>, %arg4: memref<800x512xbf16, #tpu.memory_space<vmem>>, %arg5: memref<1x512xf32, #tpu.memory_space<vmem>>, %arg6: memref<512x128xbf16, #tpu.memory_space<vmem>>, %arg7: memref<1x128xf32, #tpu.memory_space<vmem>>, %arg8: memref<8x128xf32, #tpu.memory_space<vmem>>) attributes {dimension_semantics = [#tpu.dimension_semantics<parallel>], iteration_bounds = array<i64: 1>, scalar_prefetch = 0 : i64, scratch_operands = 0 : i64, tpu.core_type = #tpu.core_type<tc>, window_params = [{transform_indices = @transform_0, window_bounds = array<i64: 8, 800>}, {transform_indices = @transform_1, window_bounds = array<i64: 8, 800>}, {pipeline_mode = #tpu.pipeline_mode<synchronous>, transform_indices = @transform_2, window_bounds = array<i64: 800, 512>}, {pipeline_mode = #tpu.pipeline_mode<synchronous>, transform_indices = @transform_3, window_bounds = array<i64: 800, 512>}, {pipeline_mode = #tpu.pipeline_mode<synchronous>, transform_indices = @transform_4, window_bounds = array<i64: 1, 512>}, {pipeline_mode = #tpu.pipeline_mode<synchronous>, transform_indices = @transform_5, window_bounds = array<i64: 512, 128>}, {pipeline_mode = #tpu.pipeline_mode<synchronous>, transform_indices = @transform_6, window_bounds = array<i64: 1, 128>}, {transform_indices = @transform_7, window_bounds = array<i64: 8, 128>}]} {
    %c0 = arith.constant 0 : index
    %c0_0 = arith.constant 0 : index
    %0 = vector.load %arg1[%c0, %c0_0] : memref<8x800xf32, #tpu.memory_space<vmem>>, vector<8x800xf32>
    %1 = arith.truncf %0 : vector<8x800xf32> to vector<8x800xbf16>
    %c0_1 = arith.constant 0 : index
    %c0_2 = arith.constant 0 : index
    %2 = vector.load %arg2[%c0_1, %c0_2] : memref<8x800xf32, #tpu.memory_space<vmem>>, vector<8x800xf32>
    %3 = arith.truncf %2 : vector<8x800xf32> to vector<8x800xbf16>
    %c0_3 = arith.constant 0 : index
    %c0_4 = arith.constant 0 : index
    %4 = vector.load %arg3[%c0_3, %c0_4] : memref<800x512xbf16, #tpu.memory_space<vmem>>, vector<800x512xbf16>
    %cst = arith.constant dense<0.000000e+00> : vector<8x512xf32>
    %5 = tpu.matmul %1, %4, %cst {dimension_numbers = #tpu.dot_dimension_numbers<[1], [0], [0], [1], [0, 0, 1, 1], [], []>} : vector<8x800xbf16>, vector<800x512xbf16>, vector<8x512xf32> -> vector<8x512xf32>
    %c0_5 = arith.constant 0 : index
    %c0_6 = arith.constant 0 : index
    %6 = vector.load %arg4[%c0_5, %c0_6] : memref<800x512xbf16, #tpu.memory_space<vmem>>, vector<800x512xbf16>
    %cst_7 = arith.constant dense<0.000000e+00> : vector<8x512xf32>
    %7 = tpu.matmul %3, %6, %cst_7 {dimension_numbers = #tpu.dot_dimension_numbers<[1], [0], [0], [1], [0, 0, 1, 1], [], []>} : vector<8x800xbf16>, vector<800x512xbf16>, vector<8x512xf32> -> vector<8x512xf32>
    %8 = arith.addf %5, %7 : vector<8x512xf32>
    %c0_8 = arith.constant 0 : index
    %c0_9 = arith.constant 0 : index
    %9 = vector.load %arg5[%c0_8, %c0_9] : memref<1x512xf32, #tpu.memory_space<vmem>>, vector<1x512xf32>
    %10 = vector.broadcast %9 : vector<1x512xf32> to vector<8x512xf32>
    %11 = arith.addf %8, %10 : vector<8x512xf32>
    %cst_10 = arith.constant 0.000000e+00 : f32
    %12 = vector.broadcast %cst_10 : f32 to vector<8x512xf32>
    %13 = arith.cmpf ogt, %11, %12 : vector<8x512xf32>
    %cst_11 = arith.constant 0.00999999977 : f32
    %14 = vector.broadcast %cst_11 : f32 to vector<8x512xf32>
    %15 = arith.mulf %14, %11 : vector<8x512xf32>
    %16 = arith.select %13, %11, %15 : vector<8x512xi1>, vector<8x512xf32>
    %17 = arith.truncf %16 : vector<8x512xf32> to vector<8x512xbf16>
    %c0_12 = arith.constant 0 : index
    %c0_13 = arith.constant 0 : index
    %18 = vector.load %arg6[%c0_12, %c0_13] : memref<512x128xbf16, #tpu.memory_space<vmem>>, vector<512x128xbf16>
    %cst_14 = arith.constant dense<0.000000e+00> : vector<8x128xf32>
    %19 = tpu.matmul %17, %18, %cst_14 {dimension_numbers = #tpu.dot_dimension_numbers<[1], [0], [0], [1], [0, 0, 1, 1], [], []>} : vector<8x512xbf16>, vector<512x128xbf16>, vector<8x128xf32> -> vector<8x128xf32>
    %c0_15 = arith.constant 0 : index
    %c0_16 = arith.constant 0 : index
    %20 = vector.load %arg7[%c0_15, %c0_16] : memref<1x128xf32, #tpu.memory_space<vmem>>, vector<1x128xf32>
    %21 = vector.broadcast %20 : vector<1x128xf32> to vector<8x128xf32>
    %22 = arith.addf %19, %21 : vector<8x128xf32>
    %c0_17 = arith.constant 0 : index
    %c0_18 = arith.constant 0 : index
    %23 = vector.load %arg8[%c0_17, %c0_18] : memref<8x128xf32, #tpu.memory_space<vmem>>, vector<8x128xf32>
    tpu.vector_store %arg8[%c0_17, %c0_18], %22 {strides = array<i32>} : memref<8x128xf32, #tpu.memory_space<vmem>>, vector<8x128xf32>,
    return
  }
  func.func @transform_0(%arg0: i32) -> (i32, i32) {
    %c0_i32 = arith.constant 0 : i32
    %c0_i32_0 = arith.constant 0 : i32
    return %arg0, %c0_i32 : i32, i32
  }
  func.func @transform_1(%arg0: i32) -> (i32, i32) {
    %c0_i32 = arith.constant 0 : i32
    %c0_i32_0 = arith.constant 0 : i32
    return %arg0, %c0_i32 : i32, i32
  }
  func.func @transform_2(%arg0: i32) -> (i32, i32) {
    %c0_i32 = arith.constant 0 : i32
    %c0_i32_0 = arith.constant 0 : i32
    %c0_i32_1 = arith.constant 0 : i32
    return %c0_i32, %c0_i32_0 : i32, i32
  }
  func.func @transform_3(%arg0: i32) -> (i32, i32) {
    %c0_i32 = arith.constant 0 : i32
    %c0_i32_0 = arith.constant 0 : i32
    %c0_i32_1 = arith.constant 0 : i32
    return %c0_i32, %c0_i32_0 : i32, i32
  }
  func.func @transform_4(%arg0: i32) -> (i32, i32) {
    %c0_i32 = arith.constant 0 : i32
    %c0_i32_0 = arith.constant 0 : i32
    %c0_i32_1 = arith.constant 0 : i32
    return %c0_i32, %c0_i32_0 : i32, i32
  }
  func.func @transform_5(%arg0: i32) -> (i32, i32) {
    %c0_i32 = arith.constant 0 : i32
    %c0_i32_0 = arith.constant 0 : i32
    %c0_i32_1 = arith.constant 0 : i32
    return %c0_i32, %c0_i32_0 : i32, i32
  }
  func.func @transform_6(%arg0: i32) -> (i32, i32) {
    %c0_i32 = arith.constant 0 : i32
    %c0_i32_0 = arith.constant 0 : i32
    %c0_i32_1 = arith.constant 0 : i32
    return %c0_i32, %c0_i32_0 : i32, i32
  }
  func.func @transform_7(%arg0: i32) -> (i32, i32) {
    %c0_i32 = arith.constant 0 : i32
    %c0_i32_0 = arith.constant 0 : i32
    return %arg0, %c0_i32 : i32, i32
  }
}

</mosaic_0001>

<llo_original>
// kernel: tpu_custom_call.1
$region0: #{tpu_custom_call.1}
  #allocation0 [shape = 'u32[]', space=smem, size = 0x4, offset = 0x4, fixed_abs, tag = 'smem constant byte address 0x4 - core index']
  #allocation1 [shape = 'u32[72,128]{1,0:T(1,128)}', space=vmem, size = 0x9000, scoped, tag = 'internal scratch']
  %s0 = inlined_call_operand.hbm [shape: f32[8,800], index: 0, kind: input, shape index: {}]
  %s1 = inlined_call_operand.hbm [shape: f32[8,800], index: 1, kind: input, shape index: {}]
  %s2 = inlined_call_operand.hbm [shape: bf16[800,512], index: 2, kind: input, shape index: {}]
  %s3 = inlined_call_operand.hbm [shape: bf16[800,512], index: 3, kind: input, shape index: {}]
  %s4 = inlined_call_operand.hbm [shape: f32[1,512], index: 4, kind: input, shape index: {}]
  %s5 = inlined_call_operand.hbm [shape: bf16[512,128], index: 5, kind: input, shape index: {}]
  %s6 = inlined_call_operand.vmem [shape: f32[1,128], index: 6, kind: input, shape index: {}]
  %s7 = inlined_call_operand.hbm [shape: f32[8,128], index: 7, kind: output, shape index: {}]
  %s8 = sld [smem:[#allocation0]]
  $region62: #{tpu_custom_call.1} parent=0
    _
  %s10 = ssub.s32 1, %s8
  %s11 = scalar_select 0, %s10, %s8
  $region1: #{tpu_custom_call.1} parent=0
    #allocation2 [shape = 'u8[28672]{0}', space=vmem, size = 0x7000, scoped, tag = 'input window, operand 0, single buffered']
    #allocation3 [shape = 's32[1]{0}', space=sflag, size = 0x4, scoped, tag = 'scoped memory for tpu_custom_call.1']
    #allocation4 [shape = 's32[1]{0}', space=sflag, size = 0x4, scoped, tag = 'scoped memory for tpu_custom_call.1']
    #allocation5 [shape = 'u8[28672]{0}', space=vmem, size = 0x7000, scoped, tag = 'input window, operand 1, single buffered']
    #allocation6 [shape = 's32[1]{0}', space=sflag, size = 0x4, scoped, tag = 'scoped memory for tpu_custom_call.1']
    #allocation7 [shape = 'u8[819200]{0}', space=vmem, size = 0xc8000, scoped, tag = 'input window, operand 2, single buffered']
    #allocation8 [shape = 'u8[819200]{0}', space=vmem, size = 0xc8000, scoped, tag = 'input window, operand 3, single buffered']
    #allocation9 [shape = 's32[1]{0}', space=sflag, size = 0x4, scoped, tag = 'scoped memory for tpu_custom_call.1']
    #allocation10 [shape = 'u8[2048]{0}', space=vmem, size = 0x800, scoped, tag = 'input window, operand 4, single buffered']
    #allocation11 [shape = 'u8[131072]{0}', space=vmem, size = 0x20000, scoped, tag = 'input window, operand 5, single buffered']
    #allocation12 [shape = 's32[1]{0}', space=sflag, size = 0x4, scoped, tag = 'scoped memory for tpu_custom_call.1']
    #allocation13 [shape = 'u8[4096]{0}', space=vmem, size = 0x1000, scoped, tag = 'output window, operand 0, single buffered']
    %12 = vsyncpa [#allocation3], 0
    %13 = vsyncpa [#allocation6], 0
    %14 = vsyncpa [#allocation9], 0
    %15 = vsyncpa [#allocation12], 0
    %16 = vsyncpa [#allocation4], 0
    // Predicated region
    $region2: #{tpu_custom_call.1} parent=1 // pred_check
      _
    $region3: #{tpu_custom_call.1} parent=1 // pred_check_branch
      %18 = sbr.rel (0) target = $region5
    $region4: #{tpu_custom_call.1} parent=1 // pred_region
      %20 = vsyncadd [#allocation3], 0
      %s22 = sshll.u32 %s0, 4
      %s23 = int_to_ptr.hbm [resolvable:$true] %s22
      %s24 = sshll.u32 [#allocation2], 4
      %s25 = int_to_ptr.vmem [resolvable:$true] %s24
      %27 = dma.hbm_to_vmem [thread:$0]  %s23, 896, %s25, [#allocation3]
    $region5: #{tpu_custom_call.1} parent=1 // pred_fallthru
      _
    // Predicated region
    $region6: #{tpu_custom_call.1} parent=1 // pred_check
      _
    $region7: #{tpu_custom_call.1} parent=1 // pred_check_branch
      %29 = sbr.rel (0) target = $region9
    $region8: #{tpu_custom_call.1} parent=1 // pred_region
      %31 = vsyncadd [#allocation6], 0
      %s33 = sshll.u32 %s1, 4
      %s34 = int_to_ptr.hbm [resolvable:$true] %s33
      %s35 = sshll.u32 [#allocation5], 4
      %s36 = int_to_ptr.vmem [resolvable:$true] %s35
      %38 = dma.hbm_to_vmem [thread:$0]  %s34, 896, %s36, [#allocation6]
    $region9: #{tpu_custom_call.1} parent=1 // pred_fallthru
      _
    // Predicated region
    $region10: #{tpu_custom_call.1} parent=1 // pred_check
      _
    $region11: #{tpu_custom_call.1} parent=1 // pred_check_branch
      %40 = sbr.rel (0) target = $region13
    $region12: #{tpu_custom_call.1} parent=1 // pred_region
      %42 = vsyncadd [#allocation6], 0
      %s43 = sshll.u32 %s2, 4
      %s44 = int_to_ptr.hbm [resolvable:$true] %s43
      %s45 = sshll.u32 [#allocation7], 4
      %s46 = int_to_ptr.vmem [resolvable:$true] %s45
      %51 = dma.hbm_to_vmem [thread:$0]  %s44, 25600, %s46, [#allocation6], 256, 256, 16
    $region13: #{tpu_custom_call.1} parent=1 // pred_fallthru
      _
    // Predicated region
    $region14: #{tpu_custom_call.1} parent=1 // pred_check
      _
    $region15: #{tpu_custom_call.1} parent=1 // pred_check_branch
      %53 = sbr.rel (0) target = $region17
    $region16: #{tpu_custom_call.1} parent=1 // pred_region
      %55 = vsyncadd [#allocation9], 0
      %s56 = sshll.u32 %s3, 4
      %s57 = int_to_ptr.hbm [resolvable:$true] %s56
      %s58 = sshll.u32 [#allocation8], 4
      %s59 = int_to_ptr.vmem [resolvable:$true] %s58
      %64 = dma.hbm_to_vmem [thread:$0]  %s57, 25600, %s59, [#allocation9], 256, 256, 16
    $region17: #{tpu_custom_call.1} parent=1 // pred_fallthru
      _
    // Predicated region
    $region18: #{tpu_custom_call.1} parent=1 // pred_check
      _
    $region19: #{tpu_custom_call.1} parent=1 // pred_check_branch
      %66 = sbr.rel (0) target = $region21
    $region20: #{tpu_custom_call.1} parent=1 // pred_region
      %68 = vsyncadd [#allocation9], 0
      %s70 = sshll.u32 %s4, 4
      %s71 = int_to_ptr.hbm [resolvable:$true] %s70
      %s72 = sshll.u32 [#allocation10], 4
      %s73 = int_to_ptr.vmem [resolvable:$true] %s72
      %75 = dma.hbm_to_vmem [thread:$0]  %s71, 64, %s73, [#allocation9]
    $region21: #{tpu_custom_call.1} parent=1 // pred_fallthru
      _
    // Predicated region
    $region22: #{tpu_custom_call.1} parent=1 // pred_check
      _
    $region23: #{tpu_custom_call.1} parent=1 // pred_check_branch
      %77 = sbr.rel (0) target = $region25
    $region24: #{tpu_custom_call.1} parent=1 // pred_region
      %79 = vsyncadd [#allocation12], 0
      %s80 = sshll.u32 %s5, 4
      %s81 = int_to_ptr.hbm [resolvable:$true] %s80
      %s82 = sshll.u32 [#allocation11], 4
      %s83 = int_to_ptr.vmem [resolvable:$true] %s82
      %88 = dma.hbm_to_vmem [thread:$0]  %s81, 4096, %s83, [#allocation12], 64, 64, 4
    $region25: #{tpu_custom_call.1} parent=1 // pred_fallthru
      _
    // Predicated region
    $region26: #{tpu_custom_call.1} parent=1 // pred_check
      _
    $region27: #{tpu_custom_call.1} parent=1 // pred_check_branch
      %90 = sbr.rel (0) target = $region29
    $region28: #{tpu_custom_call.1} parent=1 // pred_region
      _
    $region29: #{tpu_custom_call.1} parent=1 // pred_fallthru
      _
    // Predicated region
    $region30: #{tpu_custom_call.1} parent=1 // pred_check
      _
    $region31: #{tpu_custom_call.1} parent=1 // pred_check_branch
      %92 = sbr.rel (0) target = $region33
    $region32: #{tpu_custom_call.1} parent=1 // pred_region
      %94 = dma.done [#allocation3], 896
    $region33: #{tpu_custom_call.1} parent=1 // pred_fallthru
      _
    // Predicated region
    $region34: #{tpu_custom_call.1} parent=1 // pred_check
      _
    $region35: #{tpu_custom_call.1} parent=1 // pred_check_branch
      %96 = sbr.rel (0) target = $region37
    $region36: #{tpu_custom_call.1} parent=1 // pred_region
      %98 = dma.done [#allocation6], 896
    $region37: #{tpu_custom_call.1} parent=1 // pred_fallthru
      _
    // Predicated region
    $region38: #{tpu_custom_call.1} parent=1 // pred_check
      _
    $region39: #{tpu_custom_call.1} parent=1 // pred_check_branch
      %100 = sbr.rel (0) target = $region41
    $region40: #{tpu_custom_call.1} parent=1 // pred_region
      %102 = dma.done [#allocation6], 25600
    $region41: #{tpu_custom_call.1} parent=1 // pred_fallthru
      _
    // Predicated region
    $region42: #{tpu_custom_call.1} parent=1 // pred_check
      _
    $region43: #{tpu_custom_call.1} parent=1 // pred_check_branch
      %104 = sbr.rel (0) target = $region45
    $region44: #{tpu_custom_call.1} parent=1 // pred_region
      %106 = dma.done [#allocation9], 25600
    $region45: #{tpu_custom_call.1} parent=1 // pred_fallthru
      _
    // Predicated region
    $region46: #{tpu_custom_call.1} parent=1 // pred_check
      _
    $region47: #{tpu_custom_call.1} parent=1 // pred_check_branch
      %108 = sbr.rel (0) target = $region49
    $region48: #{tpu_custom_call.1} parent=1 // pred_region
      %110 = dma.done [#allocation9], 64
    $region49: #{tpu_custom_call.1} parent=1 // pred_fallthru
      _
    // Predicated region
    $region50: #{tpu_custom_call.1} parent=1 // pred_check
      _
    $region51: #{tpu_custom_call.1} parent=1 // pred_check_branch
      %112 = sbr.rel (0) target = $region53
    $region52: #{tpu_custom_call.1} parent=1 // pred_region
      %114 = dma.done [#allocation12], 4096
    $region53: #{tpu_custom_call.1} parent=1 // pred_fallthru
      _
    %v116 = vld [vmem:[#allocation2] sm:$0xff]
    %v117 = vld [vmem:[#allocation2 + $0x8] sm:$0xff]
    %v118 = vld [vmem:[#allocation2 + $0x10] sm:$0xff]
    %v119 = vld [vmem:[#allocation2 + $0x18] sm:$0xff]
    %v120 = vld [vmem:[#allocation2 + $0x20] sm:$0xff]
    %v121 = vld [vmem:[#allocation2 + $0x28] sm:$0xff]
    %v122 = vld [vmem:[#allocation2 + $0x30] sm:$0xff]
    %v123 = vpack.c.bf16 %v116, %v116
    %v124 = vpack.c.bf16 %v117, %v117
    %v125 = vpack.c.bf16 %v118, %v118
    %v126 = vpack.c.bf16 %v119, %v119
    %v127 = vpack.c.bf16 %v120, %v120
    %v128 = vpack.c.bf16 %v121, %v121
    %v129 = vpack.c.bf16 %v122, %v122
    %v130 = vld [vmem:[#allocation5] sm:$0xff]
    %v131 = vld [vmem:[#allocation5 + $0x8] sm:$0xff]
    %v132 = vld [vmem:[#allocation5 + $0x10] sm:$0xff]
    %v133 = vld [vmem:[#allocation5 + $0x18] sm:$0xff]
    %v134 = vld [vmem:[#allocation5 + $0x20] sm:$0xff]
    %v135 = vld [vmem:[#allocation5 + $0x28] sm:$0xff]
    %v136 = vld [vmem:[#allocation5 + $0x30] sm:$0xff]
    %v137 = vpack.c.bf16 %v130, %v130
    %v138 = vpack.c.bf16 %v131, %v131
    %v139 = vpack.c.bf16 %v132, %v132
    %v140 = vpack.c.bf16 %v133, %v133
    %v141 = vpack.c.bf16 %v134, %v134
    %v142 = vpack.c.bf16 %v135, %v135
    %v143 = vpack.c.bf16 %v136, %v136
    %v144 = vld [vmem:[#allocation7] sm:$0xff]
    %v145 = vld [vmem:[#allocation7 + $0x8] sm:$0xff]
    %v146 = vld [vmem:[#allocation7 + $0x10] sm:$0xff]
    %v147 = vld [vmem:[#allocation7 + $0x18] sm:$0xff]
    %v148 = vld [vmem:[#allocation7 + $0x20] sm:$0xff]
    %v149 = vld [vmem:[#allocation7 + $0x28] sm:$0xff]
    %v150 = vld [vmem:[#allocation7 + $0x30] sm:$0xff]
    %v151 = vld [vmem:[#allocation7 + $0x38] sm:$0xff]
    %v152 = vld [vmem:[#allocation7 + $0x40] sm:$0xff]
    %v153 = vld [vmem:[#allocation7 + $0x48] sm:$0xff]
    %v154 = vld [vmem:[#allocation7 + $0x50] sm:$0xff]
    %v155 = vld [vmem:[#allocation7 + $0x58] sm:$0xff]
    %v156 = vld [vmem:[#allocation7 + $0x60] sm:$0xff]
    %v157 = vld [vmem:[#allocation7 + $0x68] sm:$0xff]
    %v158 = vld [vmem:[#allocation7 + $0x70] sm:$0xff]
    %v159 = vld [vmem:[#allocation7 + $0x78] sm:$0xff]
    %v160 = vld [vmem:[#allocation7 + $0x80] sm:$0xff]
    %v161 = vld [vmem:[#allocation7 + $0x88] sm:$0xff]
    %v162 = vld [vmem:[#allocation7 + $0x90] sm:$0xff]
    %v163 = vld [vmem:[#allocation7 + $0x98] sm:$0xff]
    %v164 = vld [vmem:[#allocation7 + $0xa0] sm:$0xff]
    %v165 = vld [vmem:[#allocation7 + $0xa8] sm:$0xff]
    %v166 = vld [vmem:[#allocation7 + $0xb0] sm:$0xff]
    %v167 = vld [vmem:[#allocation7 + $0xb8] sm:$0xff]
    %v168 = vld [vmem:[#allocation7 + $0xc0] sm:$0xff]
    %v169 = vld [vmem:[#allocation7 + $0xc8] sm:$0xff]
    %v170 = vld [vmem:[#allocation7 + $0xd0] sm:$0xff]
    %v171 = vld [vmem:[#allocation7 + $0xd8] sm:$0xff]
    %v172 = vld [vmem:[#allocation7 + $0xe0] sm:$0xff]
    %v173 = vld [vmem:[#allocation7 + $0xe8] sm:$0xff]
    %v174 = vld [vmem:[#allocation7 + $0xf0] sm:$0xff]
    %v175 = vld [vmem:[#allocation7 + $0xf8] sm:$0xff]
    %v176 = vld [vmem:[#allocation7 + $0x100] sm:$0xff]
    %v177 = vld [vmem:[#allocation7 + $0x108] sm:$0xff]
    %v178 = vld [vmem:[#allocation7 + $0x110] sm:$0xff]
    %v179 = vld [vmem:[#allocation7 + $0x118] sm:$0xff]
    %v180 = vld [vmem:[#allocation7 + $0x120] sm:$0xff]
    %v181 = vld [vmem:[#allocation7 + $0x128] sm:$0xff]
    %v182 = vld [vmem:[#allocation7 + $0x130] sm:$0xff]
    %v183 = vld [vmem:[#allocation7 + $0x138] sm:$0xff]
    %v184 = vld [vmem:[#allocation7 + $0x140] sm:$0xff]
    %v185 = vld [vmem:[#allocation7 + $0x148] sm:$0xff]
    %v186 = vld [vmem:[#allocation7 + $0x150] sm:$0xff]
    %v187 = vld [vmem:[#allocation7 + $0x158] sm:$0xff]
    %v188 = vld [vmem:[#allocation7 + $0x160] sm:$0xff]
    %v189 = vld [vmem:[#allocation7 + $0x168] sm:$0xff]
    %v190 = vld [vmem:[#allocation7 + $0x170] sm:$0xff]
    %v191 = vld [vmem:[#allocation7 + $0x178] sm:$0xff]
    %v192 = vld [vmem:[#allocation7 + $0x180] sm:$0xff]
    %v193 = vld [vmem:[#allocation7 + $0x188] sm:$0xff]
    %v194 = vld [vmem:[#allocation7 + $0x190] sm:$0xff]
    %v195 = vld [vmem:[#allocation7 + $0x198] sm:$0xff]
    %v196 = vld [vmem:[#allocation7 + $0x1a0] sm:$0xff]
    %v197 = vld [vmem:[#allocation7 + $0x1a8] sm:$0xff]
    %v198 = vld [vmem:[#allocation7 + $0x1b0] sm:$0xff]
    %v199 = vld [vmem:[#allocation7 + $0x1b8] sm:$0xff]
    %v200 = vld [vmem:[#allocation7 + $0x1c0] sm:$0xff]
    %v201 = vld [vmem:[#allocation7 + $0x1c8] sm:$0xff]
    %v202 = vld [vmem:[#allocation7 + $0x1d0] sm:$0xff]
    %v203 = vld [vmem:[#allocation7 + $0x1d8] sm:$0xff]
    %v204 = vld [vmem:[#allocation7 + $0x1e0] sm:$0xff]
    %v205 = vld [vmem:[#allocation7 + $0x1e8] sm:$0xff]
    %v206 = vld [vmem:[#allocation7 + $0x1f0] sm:$0xff]
    %v207 = vld [vmem:[#allocation7 + $0x1f8] sm:$0xff]
    %v208 = vld [vmem:[#allocation7 + $0x200] sm:$0xff]
    %v209 = vld [vmem:[#allocation7 + $0x208] sm:$0xff]
    %v210 = vld [vmem:[#allocation7 + $0x210] sm:$0xff]
    %v211 = vld [vmem:[#allocation7 + $0x218] sm:$0xff]
    %v212 = vld [vmem:[#allocation7 + $0x220] sm:$0xff]
    %v213 = vld [vmem:[#allocation7 + $0x228] sm:$0xff]
    %v214 = vld [vmem:[#allocation7 + $0x230] sm:$0xff]
    %v215 = vld [vmem:[#allocation7 + $0x238] sm:$0xff]
    %v216 = vld [vmem:[#allocation7 + $0x240] sm:$0xff]
    %v217 = vld [vmem:[#allocation7 + $0x248] sm:$0xff]
    %v218 = vld [vmem:[#allocation7 + $0x250] sm:$0xff]
    %v219 = vld [vmem:[#allocation7 + $0x258] sm:$0xff]
    %v220 = vld [vmem:[#allocation7 + $0x260] sm:$0xff]
    %v221 = vld [vmem:[#allocation7 + $0x268] sm:$0xff]
    %v222 = vld [vmem:[#allocation7 + $0x270] sm:$0xff]
    %v223 = vld [vmem:[#allocation7 + $0x278] sm:$0xff]
    %v224 = vld [vmem:[#allocation7 + $0x280] sm:$0xff]
    %v225 = vld [vmem:[#allocation7 + $0x288] sm:$0xff]
    %v226 = vld [vmem:[#allocation7 + $0x290] sm:$0xff]
    %v227 = vld [vmem:[#allocation7 + $0x298] sm:$0xff]
    %v228 = vld [vmem:[#allocation7 + $0x2a0] sm:$0xff]
    %v229 = vld [vmem:[#allocation7 + $0x2a8] sm:$0xff]
    %v230 = vld [vmem:[#allocation7 + $0x2b0] sm:$0xff]
    %v231 = vld [vmem:[#allocation7 + $0x2b8] sm:$0xff]
    %v232 = vld [vmem:[#allocation7 + $0x2c0] sm:$0xff]
    %v233 = vld [vmem:[#allocation7 + $0x2c8] sm:$0xff]
    %v234 = vld [vmem:[#allocation7 + $0x2d0] sm:$0xff]
    %v235 = vld [vmem:[#allocation7 + $0x2d8] sm:$0xff]
    %v236 = vld [vmem:[#allocation7 + $0x2e0] sm:$0xff]
    %v237 = vld [vmem:[#allocation7 + $0x2e8] sm:$0xff]
    %v238 = vld [vmem:[#allocation7 + $0x2f0] sm:$0xff]
    %v239 = vld [vmem:[#allocation7 + $0x2f8] sm:$0xff]
    %v240 = vld [vmem:[#allocation7 + $0x300] sm:$0xff]
    %v241 = vld [vmem:[#allocation7 + $0x308] sm:$0xff]
    %v242 = vld [vmem:[#allocation7 + $0x310] sm:$0xff]
    %v243 = vld [vmem:[#allocation7 + $0x318] sm:$0xff]
    %v244 = vld [vmem:[#allocation7 + $0x320] sm:$0xff]
    %v245 = vld [vmem:[#allocation7 + $0x328] sm:$0xff]
    %v246 = vld [vmem:[#allocation7 + $0x330] sm:$0xff]
    %v247 = vld [vmem:[#allocation7 + $0x338] sm:$0xff]
    %v248 = vld [vmem:[#allocation7 + $0x340] sm:$0xff]
    %v249 = vld [vmem:[#allocation7 + $0x348] sm:$0xff]
    %v250 = vld [vmem:[#allocation7 + $0x350] sm:$0xff]
    %v251 = vld [vmem:[#allocation7 + $0x358] sm:$0xff]
    %v252 = vld [vmem:[#allocation7 + $0x360] sm:$0xff]
    %v253 = vld [vmem:[#allocation7 + $0x368] sm:$0xff]
    %v254 = vld [vmem:[#allocation7 + $0x370] sm:$0xff]
    %v255 = vld [vmem:[#allocation7 + $0x378] sm:$0xff]
    %v256 = vld [vmem:[#allocation7 + $0x380] sm:$0xff]
    %v257 = vld [vmem:[#allocation7 + $0x388] sm:$0xff]
    %v258 = vld [vmem:[#allocation7 + $0x390] sm:$0xff]
    %v259 = vld [vmem:[#allocation7 + $0x398] sm:$0xff]
    %v260 = vld [vmem:[#allocation7 + $0x3a0] sm:$0xff]
    %v261 = vld [vmem:[#allocation7 + $0x3a8] sm:$0xff]
    %v262 = vld [vmem:[#allocation7 + $0x3b0] sm:$0xff]
    %v263 = vld [vmem:[#allocation7 + $0x3b8] sm:$0xff]
    %v264 = vld [vmem:[#allocation7 + $0x3c0] sm:$0xff]
    %v265 = vld [vmem:[#allocation7 + $0x3c8] sm:$0xff]
    %v266 = vld [vmem:[#allocation7 + $0x3d0] sm:$0xff]
    %v267 = vld [vmem:[#allocation7 + $0x3d8] sm:$0xff]
    %v268 = vld [vmem:[#allocation7 + $0x3e0] sm:$0xff]
    %v269 = vld [vmem:[#allocation7 + $0x3e8] sm:$0xff]
    %v270 = vld [vmem:[#allocation7 + $0x3f0] sm:$0xff]
    %v271 = vld [vmem:[#allocation7 + $0x3f8] sm:$0xff]
    %v272 = vld [vmem:[#allocation7 + $0x400] sm:$0xff]
    %v273 = vld [vmem:[#allocation7 + $0x408] sm:$0xff]
    %v274 = vld [vmem:[#allocation7 + $0x410] sm:$0xff]
    %v275 = vld [vmem:[#allocation7 + $0x418] sm:$0xff]
    %v276 = vld [vmem:[#allocation7 + $0x420] sm:$0xff]
    %v277 = vld [vmem:[#allocation7 + $0x428] sm:$0xff]
    %v278 = vld [vmem:[#allocation7 + $0x430] sm:$0xff]
    %v279 = vld [vmem:[#allocation7 + $0x438] sm:$0xff]
    %v280 = vld [vmem:[#allocation7 + $0x440] sm:$0xff]
    %v281 = vld [vmem:[#allocation7 + $0x448] sm:$0xff]
    %v282 = vld [vmem:[#allocation7 + $0x450] sm:$0xff]
    %v283 = vld [vmem:[#allocation7 + $0x458] sm:$0xff]
    %v284 = vld [vmem:[#allocation7 + $0x460] sm:$0xff]
    %v285 = vld [vmem:[#allocation7 + $0x468] sm:$0xff]
    %v286 = vld [vmem:[#allocation7 + $0x470] sm:$0xff]
    %v287 = vld [vmem:[#allocation7 + $0x478] sm:$0xff]
    %v288 = vld [vmem:[#allocation7 + $0x480] sm:$0xff]
    %v289 = vld [vmem:[#allocation7 + $0x488] sm:$0xff]
    %v290 = vld [vmem:[#allocation7 + $0x490] sm:$0xff]
    %v291 = vld [vmem:[#allocation7 + $0x498] sm:$0xff]
    %v292 = vld [vmem:[#allocation7 + $0x4a0] sm:$0xff]
    %v293 = vld [vmem:[#allocation7 + $0x4a8] sm:$0xff]
    %v294 = vld [vmem:[#allocation7 + $0x4b0] sm:$0xff]
    %v295 = vld [vmem:[#allocation7 + $0x4b8] sm:$0xff]
    %v296 = vld [vmem:[#allocation7 + $0x4c0] sm:$0xff]
    %v297 = vld [vmem:[#allocation7 + $0x4c8] sm:$0xff]
    %v298 = vld [vmem:[#allocation7 + $0x4d0] sm:$0xff]
    %v299 = vld [vmem:[#allocation7 + $0x4d8] sm:$0xff]
    %v300 = vld [vmem:[#allocation7 + $0x4e0] sm:$0xff]
    %v301 = vld [vmem:[#allocation7 + $0x4e8] sm:$0xff]
    %v302 = vld [vmem:[#allocation7 + $0x4f0] sm:$0xff]
    %v303 = vld [vmem:[#allocation7 + $0x4f8] sm:$0xff]
    %v304 = vld [vmem:[#allocation7 + $0x500] sm:$0xff]
    %v305 = vld [vmem:[#allocation7 + $0x508] sm:$0xff]
    %v306 = vld [vmem:[#allocation7 + $0x510] sm:$0xff]
    %v307 = vld [vmem:[#allocation7 + $0x518] sm:$0xff]
    %v308 = vld [vmem:[#allocation7 + $0x520] sm:$0xff]
    %v309 = vld [vmem:[#allocation7 + $0x528] sm:$0xff]
    %v310 = vld [vmem:[#allocation7 + $0x530] sm:$0xff]
    %v311 = vld [vmem:[#allocation7 + $0x538] sm:$0xff]
    %v312 = vld [vmem:[#allocation7 + $0x540] sm:$0xff]
    %v313 = vld [vmem:[#allocation7 + $0x548] sm:$0xff]
    %v314 = vld [vmem:[#allocation7 + $0x550] sm:$0xff]
    %v315 = vld [vmem:[#allocation7 + $0x558] sm:$0xff]
    %v316 = vld [vmem:[#allocation7 + $0x560] sm:$0xff]
    %v317 = vld [vmem:[#allocation7 + $0x568] sm:$0xff]
    %v318 = vld [vmem:[#allocation7 + $0x570] sm:$0xff]
    %v319 = vld [vmem:[#allocation7 + $0x578] sm:$0xff]
    %v320 = vld [vmem:[#allocation7 + $0x580] sm:$0xff]
    %v321 = vld [vmem:[#allocation7 + $0x588] sm:$0xff]
    %v322 = vld [vmem:[#allocation7 + $0x590] sm:$0xff]
    %v323 = vld [vmem:[#allocation7 + $0x598] sm:$0xff]
    %v324 = vld [vmem:[#allocation7 + $0x5a0] sm:$0xff]
    %v325 = vld [vmem:[#allocation7 + $0x5a8] sm:$0xff]
    %v326 = vld [vmem:[#allocation7 + $0x5b0] sm:$0xff]
    %v327 = vld [vmem:[#allocation7 + $0x5b8] sm:$0xff]
    %v328 = vld [vmem:[#allocation7 + $0x5c0] sm:$0xff]
    %v329 = vld [vmem:[#allocation7 + $0x5c8] sm:$0xff]
    %v330 = vld [vmem:[#allocation7 + $0x5d0] sm:$0xff]
    %v331 = vld [vmem:[#allocation7 + $0x5d8] sm:$0xff]
    %v332 = vld [vmem:[#allocation7 + $0x5e0] sm:$0xff]
    %v333 = vld [vmem:[#allocation7 + $0x5e8] sm:$0xff]
    %v334 = vld [vmem:[#allocation7 + $0x5f0] sm:$0xff]
    %v335 = vld [vmem:[#allocation7 + $0x5f8] sm:$0xff]
    %v336 = vld [vmem:[#allocation7 + $0x600] sm:$0xff]
    %v337 = vld [vmem:[#allocation7 + $0x608] sm:$0xff]
    %v338 = vld [vmem:[#allocation7 + $0x610] sm:$0xff]
    %v339 = vld [vmem:[#allocation7 + $0x618] sm:$0xff]
    %v340 = vld [vmem:[#allocation7 + $0x620] sm:$0xff]
    %v341 = vld [vmem:[#allocation7 + $0x628] sm:$0xff]
    %v342 = vld [vmem:[#allocation7 + $0x630] sm:$0xff]
    %v343 = vld [vmem:[#allocation7 + $0x638] sm:$0xff]
    %v344 = vld [vmem:[#allocation8] sm:$0xff]
    %v345 = vld [vmem:[#allocation8 + $0x8] sm:$0xff]
    %v346 = vld [vmem:[#allocation8 + $0x10] sm:$0xff]
    %v347 = vld [vmem:[#allocation8 + $0x18] sm:$0xff]
    %v348 = vld [vmem:[#allocation8 + $0x20] sm:$0xff]
    %v349 = vld [vmem:[#allocation8 + $0x28] sm:$0xff]
    %v350 = vld [vmem:[#allocation8 + $0x30] sm:$0xff]
    %v351 = vld [vmem:[#allocation8 + $0x38] sm:$0xff]
    %v352 = vld [vmem:[#allocation8 + $0x40] sm:$0xff]
    %v353 = vld [vmem:[#allocation8 + $0x48] sm:$0xff]
    %v354 = vld [vmem:[#allocation8 + $0x50] sm:$0xff]
    %v355 = vld [vmem:[#allocation8 + $0x58] sm:$0xff]
    %v356 = vld [vmem:[#allocation8 + $0x60] sm:$0xff]
    %v357 = vld [vmem:[#allocation8 + $0x68] sm:$0xff]
    %v358 = vld [vmem:[#allocation8 + $0x70] sm:$0xff]
    %v359 = vld [vmem:[#allocation8 + $0x78] sm:$0xff]
    %v360 = vld [vmem:[#allocation8 + $0x80] sm:$0xff]
    %v361 = vld [vmem:[#allocation8 + $0x88] sm:$0xff]
    %v362 = vld [vmem:[#allocation8 + $0x90] sm:$0xff]
    %v363 = vld [vmem:[#allocation8 + $0x98] sm:$0xff]
    %v364 = vld [vmem:[#allocation8 + $0xa0] sm:$0xff]
    %v365 = vld [vmem:[#allocation8 + $0xa8] sm:$0xff]
    %v366 = vld [vmem:[#allocation8 + $0xb0] sm:$0xff]
    %v367 = vld [vmem:[#allocation8 + $0xb8] sm:$0xff]
    %v368 = vld [vmem:[#allocation8 + $0xc0] sm:$0xff]
    %v369 = vld [vmem:[#allocation8 + $0xc8] sm:$0xff]
    %v370 = vld [vmem:[#allocation8 + $0xd0] sm:$0xff]
    %v371 = vld [vmem:[#allocation8 + $0xd8] sm:$0xff]
    %v372 = vld [vmem:[#allocation8 + $0xe0] sm:$0xff]
    %v373 = vld [vmem:[#allocation8 + $0xe8] sm:$0xff]
    %v374 = vld [vmem:[#allocation8 + $0xf0] sm:$0xff]
    %v375 = vld [vmem:[#allocation8 + $0xf8] sm:$0xff]
    %v376 = vld [vmem:[#allocation8 + $0x100] sm:$0xff]
    %v377 = vld [vmem:[#allocation8 + $0x108] sm:$0xff]
    %v378 = vld [vmem:[#allocation8 + $0x110] sm:$0xff]
    %v379 = vld [vmem:[#allocation8 + $0x118] sm:$0xff]
    %v380 = vld [vmem:[#allocation8 + $0x120] sm:$0xff]
    %v381 = vld [vmem:[#allocation8 + $0x128] sm:$0xff]
    %v382 = vld [vmem:[#allocation8 + $0x130] sm:$0xff]
    %v383 = vld [vmem:[#allocation8 + $0x138] sm:$0xff]
    %v384 = vld [vmem:[#allocation8 + $0x140] sm:$0xff]
    %v385 = vld [vmem:[#allocation8 + $0x148] sm:$0xff]
    %v386 = vld [vmem:[#allocation8 + $0x150] sm:$0xff]
    %v387 = vld [vmem:[#allocation8 + $0x158] sm:$0xff]
    %v388 = vld [vmem:[#allocation8 + $0x160] sm:$0xff]
    %v389 = vld [vmem:[#allocation8 + $0x168] sm:$0xff]
    %v390 = vld [vmem:[#allocation8 + $0x170] sm:$0xff]
    %v391 = vld [vmem:[#allocation8 + $0x178] sm:$0xff]
    %v392 = vld [vmem:[#allocation8 + $0x180] sm:$0xff]
    %v393 = vld [vmem:[#allocation8 + $0x188] sm:$0xff]
    %v394 = vld [vmem:[#allocation8 + $0x190] sm:$0xff]
    %v395 = vld [vmem:[#allocation8 + $0x198] sm:$0xff]
    %v396 = vld [vmem:[#allocation8 + $0x1a0] sm:$0xff]
    %v397 = vld [vmem:[#allocation8 + $0x1a8] sm:$0xff]
    %v398 = vld [vmem:[#allocation8 + $0x1b0] sm:$0xff]
    %v399 = vld [vmem:[#allocation8 + $0x1b8] sm:$0xff]
    %v400 = vld [vmem:[#allocation8 + $0x1c0] sm:$0xff]
    %v401 = vld [vmem:[#allocation8 + $0x1c8] sm:$0xff]
    %v402 = vld [vmem:[#allocation8 + $0x1d0] sm:$0xff]
    %v403 = vld [vmem:[#allocation8 + $0x1d8] sm:$0xff]
    %v404 = vld [vmem:[#allocation8 + $0x1e0] sm:$0xff]
    %v405 = vld [vmem:[#allocation8 + $0x1e8] sm:$0xff]
    %v406 = vld [vmem:[#allocation8 + $0x1f0] sm:$0xff]
    %v407 = vld [vmem:[#allocation8 + $0x1f8] sm:$0xff]
    %v408 = vld [vmem:[#allocation8 + $0x200] sm:$0xff]
    %v409 = vld [vmem:[#allocation8 + $0x208] sm:$0xff]
    %v410 = vld [vmem:[#allocation8 + $0x210] sm:$0xff]
    %v411 = vld [vmem:[#allocation8 + $0x218] sm:$0xff]
    %v412 = vld [vmem:[#allocation8 + $0x220] sm:$0xff]
    %v413 = vld [vmem:[#allocation8 + $0x228] sm:$0xff]
    %v414 = vld [vmem:[#allocation8 + $0x230] sm:$0xff]
    %v415 = vld [vmem:[#allocation8 + $0x238] sm:$0xff]
    %v416 = vld [vmem:[#allocation8 + $0x240] sm:$0xff]
    %v417 = vld [vmem:[#allocation8 + $0x248] sm:$0xff]
    %v418 = vld [vmem:[#allocation8 + $0x250] sm:$0xff]
    %v419 = vld [vmem:[#allocation8 + $0x258] sm:$0xff]
    %v420 = vld [vmem:[#allocation8 + $0x260] sm:$0xff]
    %v421 = vld [vmem:[#allocation8 + $0x268] sm:$0xff]
    %v422 = vld [vmem:[#allocation8 + $0x270] sm:$0xff]
    %v423 = vld [vmem:[#allocation8 + $0x278] sm:$0xff]
    %v424 = vld [vmem:[#allocation8 + $0x280] sm:$0xff]
    %v425 = vld [vmem:[#allocation8 + $0x288] sm:$0xff]
    %v426 = vld [vmem:[#allocation8 + $0x290] sm:$0xff]
    %v427 = vld [vmem:[#allocation8 + $0x298] sm:$0xff]
    %v428 = vld [vmem:[#allocation8 + $0x2a0] sm:$0xff]
    %v429 = vld [vmem:[#allocation8 + $0x2a8] sm:$0xff]
    %v430 = vld [vmem:[#allocation8 + $0x2b0] sm:$0xff]
    %v431 = vld [vmem:[#allocation8 + $0x2b8] sm:$0xff]
    %v432 = vld [vmem:[#allocation8 + $0x2c0] sm:$0xff]
    %v433 = vld [vmem:[#allocation8 + $0x2c8] sm:$0xff]
    %v434 = vld [vmem:[#allocation8 + $0x2d0] sm:$0xff]
    %v435 = vld [vmem:[#allocation8 + $0x2d8] sm:$0xff]
    %v436 = vld [vmem:[#allocation8 + $0x2e0] sm:$0xff]
    %v437 = vld [vmem:[#allocation8 + $0x2e8] sm:$0xff]
    %v438 = vld [vmem:[#allocation8 + $0x2f0] sm:$0xff]
    %v439 = vld [vmem:[#allocation8 + $0x2f8] sm:$0xff]
    %v440 = vld [vmem:[#allocation8 + $0x300] sm:$0xff]
    %v441 = vld [vmem:[#allocation8 + $0x308] sm:$0xff]
    %v442 = vld [vmem:[#allocation8 + $0x310] sm:$0xff]
    %v443 = vld [vmem:[#allocation8 + $0x318] sm:$0xff]
    %v444 = vld [vmem:[#allocation8 + $0x320] sm:$0xff]
    %v445 = vld [vmem:[#allocation8 + $0x328] sm:$0xff]
    %v446 = vld [vmem:[#allocation8 + $0x330] sm:$0xff]
    %v447 = vld [vmem:[#allocation8 + $0x338] sm:$0xff]
    %v448 = vld [vmem:[#allocation8 + $0x340] sm:$0xff]
    %v449 = vld [vmem:[#allocation8 + $0x348] sm:$0xff]
    %v450 = vld [vmem:[#allocation8 + $0x350] sm:$0xff]
    %v451 = vld [vmem:[#allocation8 + $0x358] sm:$0xff]
    %v452 = vld [vmem:[#allocation8 + $0x360] sm:$0xff]
    %v453 = vld [vmem:[#allocation8 + $0x368] sm:$0xff]
    %v454 = vld [vmem:[#allocation8 + $0x370] sm:$0xff]
    %v455 = vld [vmem:[#allocation8 + $0x378] sm:$0xff]
    %v456 = vld [vmem:[#allocation8 + $0x380] sm:$0xff]
    %v457 = vld [vmem:[#allocation8 + $0x388] sm:$0xff]
    %v458 = vld [vmem:[#allocation8 + $0x390] sm:$0xff]
    %v459 = vld [vmem:[#allocation8 + $0x398] sm:$0xff]
    %v460 = vld [vmem:[#allocation8 + $0x3a0] sm:$0xff]
    %v461 = vld [vmem:[#allocation8 + $0x3a8] sm:$0xff]
    %v462 = vld [vmem:[#allocation8 + $0x3b0] sm:$0xff]
    %v463 = vld [vmem:[#allocation8 + $0x3b8] sm:$0xff]
    %v464 = vld [vmem:[#allocation8 + $0x3c0] sm:$0xff]
    %v465 = vld [vmem:[#allocation8 + $0x3c8] sm:$0xff]
    %v466 = vld [vmem:[#allocation8 + $0x3d0] sm:$0xff]
    %v467 = vld [vmem:[#allocation8 + $0x3d8] sm:$0xff]
    %v468 = vld [vmem:[#allocation8 + $0x3e0] sm:$0xff]
    %v469 = vld [vmem:[#allocation8 + $0x3e8] sm:$0xff]
    %v470 = vld [vmem:[#allocation8 + $0x3f0] sm:$0xff]
    %v471 = vld [vmem:[#allocation8 + $0x3f8] sm:$0xff]
    %v472 = vld [vmem:[#allocation8 + $0x400] sm:$0xff]
    %v473 = vld [vmem:[#allocation8 + $0x408] sm:$0xff]
    %v474 = vld [vmem:[#allocation8 + $0x410] sm:$0xff]
    %v475 = vld [vmem:[#allocation8 + $0x418] sm:$0xff]
    %v476 = vld [vmem:[#allocation8 + $0x420] sm:$0xff]
    %v477 = vld [vmem:[#allocation8 + $0x428] sm:$0xff]
    %v478 = vld [vmem:[#allocation8 + $0x430] sm:$0xff]
    %v479 = vld [vmem:[#allocation8 + $0x438] sm:$0xff]
    %v480 = vld [vmem:[#allocation8 + $0x440] sm:$0xff]
    %v481 = vld [vmem:[#allocation8 + $0x448] sm:$0xff]
    %v482 = vld [vmem:[#allocation8 + $0x450] sm:$0xff]
    %v483 = vld [vmem:[#allocation8 + $0x458] sm:$0xff]
    %v484 = vld [vmem:[#allocation8 + $0x460] sm:$0xff]
    %v485 = vld [vmem:[#allocation8 + $0x468] sm:$0xff]
    %v486 = vld [vmem:[#allocation8 + $0x470] sm:$0xff]
    %v487 = vld [vmem:[#allocation8 + $0x478] sm:$0xff]
    %v488 = vld [vmem:[#allocation8 + $0x480] sm:$0xff]
    %v489 = vld [vmem:[#allocation8 + $0x488] sm:$0xff]
    %v490 = vld [vmem:[#allocation8 + $0x490] sm:$0xff]
    %v491 = vld [vmem:[#allocation8 + $0x498] sm:$0xff]
    %v492 = vld [vmem:[#allocation8 + $0x4a0] sm:$0xff]
    %v493 = vld [vmem:[#allocation8 + $0x4a8] sm:$0xff]
    %v494 = vld [vmem:[#allocation8 + $0x4b0] sm:$0xff]
    %v495 = vld [vmem:[#allocation8 + $0x4b8] sm:$0xff]
    %v496 = vld [vmem:[#allocation8 + $0x4c0] sm:$0xff]
    %v497 = vld [vmem:[#allocation8 + $0x4c8] sm:$0xff]
    %v498 = vld [vmem:[#allocation8 + $0x4d0] sm:$0xff]
    %v499 = vld [vmem:[#allocation8 + $0x4d8] sm:$0xff]
    %v500 = vld [vmem:[#allocation8 + $0x4e0] sm:$0xff]
    %v501 = vld [vmem:[#allocation8 + $0x4e8] sm:$0xff]
    %v502 = vld [vmem:[#allocation8 + $0x4f0] sm:$0xff]
    %v503 = vld [vmem:[#allocation8 + $0x4f8] sm:$0xff]
    %v504 = vld [vmem:[#allocation8 + $0x500] sm:$0xff]
    %v505 = vld [vmem:[#allocation8 + $0x508] sm:$0xff]
    %v506 = vld [vmem:[#allocation8 + $0x510] sm:$0xff]
    %v507 = vld [vmem:[#allocation8 + $0x518] sm:$0xff]
    %v508 = vld [vmem:[#allocation8 + $0x520] sm:$0xff]
    %v509 = vld [vmem:[#allocation8 + $0x528] sm:$0xff]
    %v510 = vld [vmem:[#allocation8 + $0x530] sm:$0xff]
    %v511 = vld [vmem:[#allocation8 + $0x538] sm:$0xff]
    %v512 = vld [vmem:[#allocation8 + $0x540] sm:$0xff]
    %v513 = vld [vmem:[#allocation8 + $0x548] sm:$0xff]
    %v514 = vld [vmem:[#allocation8 + $0x550] sm:$0xff]
    %v515 = vld [vmem:[#allocation8 + $0x558] sm:$0xff]
    %v516 = vld [vmem:[#allocation8 + $0x560] sm:$0xff]
    %v517 = vld [vmem:[#allocation8 + $0x568] sm:$0xff]
    %v518 = vld [vmem:[#allocation8 + $0x570] sm:$0xff]
    %v519 = vld [vmem:[#allocation8 + $0x578] sm:$0xff]
    %v520 = vld [vmem:[#allocation8 + $0x580] sm:$0xff]
    %v521 = vld [vmem:[#allocation8 + $0x588] sm:$0xff]
    %v522 = vld [vmem:[#allocation8 + $0x590] sm:$0xff]
    %v523 = vld [vmem:[#allocation8 + $0x598] sm:$0xff]
    %v524 = vld [vmem:[#allocation8 + $0x5a0] sm:$0xff]
    %v525 = vld [vmem:[#allocation8 + $0x5a8] sm:$0xff]
    %v526 = vld [vmem:[#allocation8 + $0x5b0] sm:$0xff]
    %v527 = vld [vmem:[#allocation8 + $0x5b8] sm:$0xff]
    %v528 = vld [vmem:[#allocation8 + $0x5c0] sm:$0xff]
    %v529 = vld [vmem:[#allocation8 + $0x5c8] sm:$0xff]
    %v530 = vld [vmem:[#allocation8 + $0x5d0] sm:$0xff]
    %v531 = vld [vmem:[#allocation8 + $0x5d8] sm:$0xff]
    %v532 = vld [vmem:[#allocation8 + $0x5e0] sm:$0xff]
    %v533 = vld [vmem:[#allocation8 + $0x5e8] sm:$0xff]
    %v534 = vld [vmem:[#allocation8 + $0x5f0] sm:$0xff]
    %v535 = vld [vmem:[#allocation8 + $0x5f8] sm:$0xff]
    %v536 = vld [vmem:[#allocation8 + $0x600] sm:$0xff]
    %v537 = vld [vmem:[#allocation8 + $0x608] sm:$0xff]
    %v538 = vld [vmem:[#allocation8 + $0x610] sm:$0xff]
    %v539 = vld [vmem:[#allocation8 + $0x618] sm:$0xff]
    %v540 = vld [vmem:[#allocation8 + $0x620] sm:$0xff]
    %v541 = vld [vmem:[#allocation8 + $0x628] sm:$0xff]
    %v542 = vld [vmem:[#allocation8 + $0x630] sm:$0xff]
    %v543 = vld [vmem:[#allocation8 + $0x638] sm:$0xff]
    %v744 = vunpack.c.l.b16 %v344
    %v745 = vunpack.c.h.b16 %v344
    %v746 = vunpack.c.l.b16 %v345
    %v747 = vunpack.c.h.b16 %v345
    %v748 = vunpack.c.l.b16 %v346
    %v749 = vunpack.c.h.b16 %v346
    %v750 = vunpack.c.l.b16 %v347
    %v751 = vunpack.c.h.b16 %v347
    %v752 = vunpack.c.l.b16 %v348
    %v753 = vunpack.c.h.b16 %v348
    %v754 = vunpack.c.l.b16 %v349
    %v755 = vunpack.c.h.b16 %v349
    %v756 = vunpack.c.l.b16 %v350
    %v757 = vunpack.c.h.b16 %v350
    %v758 = vunpack.c.l.b16 %v351
    %v759 = vunpack.c.h.b16 %v351
    %v760 = vunpack.c.l.b16 %v352
    %v761 = vunpack.c.h.b16 %v352
    %v762 = vunpack.c.l.b16 %v353
    %v763 = vunpack.c.h.b16 %v353
    %v764 = vunpack.c.l.b16 %v354
    %v765 = vunpack.c.h.b16 %v354
    %v766 = vunpack.c.l.b16 %v355
    %v767 = vunpack.c.h.b16 %v355
    %v768 = vunpack.c.l.b16 %v356
    %v769 = vunpack.c.h.b16 %v356
    %v770 = vunpack.c.l.b16 %v357
    %v771 = vunpack.c.h.b16 %v357
    %v772 = vunpack.c.l.b16 %v358
    %v773 = vunpack.c.h.b16 %v358
    %v774 = vunpack.c.l.b16 %v359
    %v775 = vunpack.c.h.b16 %v359
    %v776 = vunpack.c.l.b16 %v360
    %v777 = vunpack.c.h.b16 %v360
    %v778 = vunpack.c.l.b16 %v361
    %v779 = vunpack.c.h.b16 %v361
    %v780 = vunpack.c.l.b16 %v362
    %v781 = vunpack.c.h.b16 %v362
    %v782 = vunpack.c.l.b16 %v363
    %v783 = vunpack.c.h.b16 %v363
    %v784 = vunpack.c.l.b16 %v364
    %v785 = vunpack.c.h.b16 %v364
    %v786 = vunpack.c.l.b16 %v365
    %v787 = vunpack.c.h.b16 %v365
    %v788 = vunpack.c.l.b16 %v366
    %v789 = vunpack.c.h.b16 %v366
    %v790 = vunpack.c.l.b16 %v367
    %v791 = vunpack.c.h.b16 %v367
    %v792 = vunpack.c.l.b16 %v368
    %v793 = vunpack.c.h.b16 %v368
    %v794 = vunpack.c.l.b16 %v369
    %v795 = vunpack.c.h.b16 %v369
    %v796 = vunpack.c.l.b16 %v370
    %v797 = vunpack.c.h.b16 %v370
    %v798 = vunpack.c.l.b16 %v371
    %v799 = vunpack.c.h.b16 %v371
    %v800 = vunpack.c.l.b16 %v372
    %v801 = vunpack.c.h.b16 %v372
    %v802 = vunpack.c.l.b16 %v373
    %v803 = vunpack.c.h.b16 %v373
    %v804 = vunpack.c.l.b16 %v374
    %v805 = vunpack.c.h.b16 %v374
    %v806 = vunpack.c.l.b16 %v375
    %v807 = vunpack.c.h.b16 %v375
    %v808 = vunpack.c.l.b16 %v376
    %v809 = vunpack.c.h.b16 %v376
    %v810 = vunpack.c.l.b16 %v377
    %v811 = vunpack.c.h.b16 %v377
    %v812 = vunpack.c.l.b16 %v378
    %v813 = vunpack.c.h.b16 %v378
    %v814 = vunpack.c.l.b16 %v379
    %v815 = vunpack.c.h.b16 %v379
    %v816 = vunpack.c.l.b16 %v380
    %v817 = vunpack.c.h.b16 %v380
    %v818 = vunpack.c.l.b16 %v381
    %v819 = vunpack.c.h.b16 %v381
    %v820 = vunpack.c.l.b16 %v382
    %v821 = vunpack.c.h.b16 %v382
    %v822 = vunpack.c.l.b16 %v383
    %v823 = vunpack.c.h.b16 %v383
    %v824 = vunpack.c.l.b16 %v384
    %v825 = vunpack.c.h.b16 %v384
    %v826 = vunpack.c.l.b16 %v385
    %v827 = vunpack.c.h.b16 %v385
    %v828 = vunpack.c.l.b16 %v386
    %v829 = vunpack.c.h.b16 %v386
    %v830 = vunpack.c.l.b16 %v387
    %v831 = vunpack.c.h.b16 %v387
    %v832 = vunpack.c.l.b16 %v388
    %v833 = vunpack.c.h.b16 %v388
    %v834 = vunpack.c.l.b16 %v389
    %v835 = vunpack.c.h.b16 %v389
    %v836 = vunpack.c.l.b16 %v390
    %v837 = vunpack.c.h.b16 %v390
    %v838 = vunpack.c.l.b16 %v391
    %v839 = vunpack.c.h.b16 %v391
    %v840 = vunpack.c.l.b16 %v392
    %v841 = vunpack.c.h.b16 %v392
    %v842 = vunpack.c.l.b16 %v393
    %v843 = vunpack.c.h.b16 %v393
    %v844 = vunpack.c.l.b16 %v394
    %v845 = vunpack.c.h.b16 %v394
    %v846 = vunpack.c.l.b16 %v395
    %v847 = vunpack.c.h.b16 %v395
    %v848 = vunpack.c.l.b16 %v396
    %v849 = vunpack.c.h.b16 %v396
    %v850 = vunpack.c.l.b16 %v397
    %v851 = vunpack.c.h.b16 %v397
    %v852 = vunpack.c.l.b16 %v398
    %v853 = vunpack.c.h.b16 %v398
    %v854 = vunpack.c.l.b16 %v399
    %v855 = vunpack.c.h.b16 %v399
    %v856 = vunpack.c.l.b16 %v400
    %v857 = vunpack.c.h.b16 %v400
    %v858 = vunpack.c.l.b16 %v401
    %v859 = vunpack.c.h.b16 %v401
    %v860 = vunpack.c.l.b16 %v402
    %v861 = vunpack.c.h.b16 %v402
    %v862 = vunpack.c.l.b16 %v403
    %v863 = vunpack.c.h.b16 %v403
    %v864 = vunpack.c.l.b16 %v404
    %v865 = vunpack.c.h.b16 %v404
    %v866 = vunpack.c.l.b16 %v405
    %v867 = vunpack.c.h.b16 %v405
    %v868 = vunpack.c.l.b16 %v406
    %v869 = vunpack.c.h.b16 %v406
    %v870 = vunpack.c.l.b16 %v407
    %v871 = vunpack.c.h.b16 %v407
    %v872 = vunpack.c.l.b16 %v408
    %v873 = vunpack.c.h.b16 %v408
    %v874 = vunpack.c.l.b16 %v409
    %v875 = vunpack.c.h.b16 %v409
    %v876 = vunpack.c.l.b16 %v410
    %v877 = vunpack.c.h.b16 %v410
    %v878 = vunpack.c.l.b16 %v411
    %v879 = vunpack.c.h.b16 %v411
    %v880 = vunpack.c.l.b16 %v412
    %v881 = vunpack.c.h.b16 %v412
    %v882 = vunpack.c.l.b16 %v413
    %v883 = vunpack.c.h.b16 %v413
    %v884 = vunpack.c.l.b16 %v414
    %v885 = vunpack.c.h.b16 %v414
    %v886 = vunpack.c.l.b16 %v415
    %v887 = vunpack.c.h.b16 %v415
    %v888 = vunpack.c.l.b16 %v416
    %v889 = vunpack.c.h.b16 %v416
    %v890 = vunpack.c.l.b16 %v417
    %v891 = vunpack.c.h.b16 %v417
    %v892 = vunpack.c.l.b16 %v418
    %v893 = vunpack.c.h.b16 %v418
    %v894 = vunpack.c.l.b16 %v419
    %v895 = vunpack.c.h.b16 %v419
    %v896 = vunpack.c.l.b16 %v420
    %v897 = vunpack.c.h.b16 %v420
    %v898 = vunpack.c.l.b16 %v421
    %v899 = vunpack.c.h.b16 %v421
    %v900 = vunpack.c.l.b16 %v422
    %v901 = vunpack.c.h.b16 %v422
    %v902 = vunpack.c.l.b16 %v423
    %v903 = vunpack.c.h.b16 %v423
    %v904 = vunpack.c.l.b16 %v424
    %v905 = vunpack.c.h.b16 %v424
    %v906 = vunpack.c.l.b16 %v425
    %v907 = vunpack.c.h.b16 %v425
    %v908 = vunpack.c.l.b16 %v426
    %v909 = vunpack.c.h.b16 %v426
    %v910 = vunpack.c.l.b16 %v427
    %v911 = vunpack.c.h.b16 %v427
    %v912 = vunpack.c.l.b16 %v428
    %v913 = vunpack.c.h.b16 %v428
    %v914 = vunpack.c.l.b16 %v429
    %v915 = vunpack.c.h.b16 %v429
    %v916 = vunpack.c.l.b16 %v430
    %v917 = vunpack.c.h.b16 %v430
    %v918 = vunpack.c.l.b16 %v431
    %v919 = vunpack.c.h.b16 %v431
    %v920 = vunpack.c.l.b16 %v432
    %v921 = vunpack.c.h.b16 %v432
    %v922 = vunpack.c.l.b16 %v433
    %v923 = vunpack.c.h.b16 %v433
    %v924 = vunpack.c.l.b16 %v434
    %v925 = vunpack.c.h.b16 %v434
    %v926 = vunpack.c.l.b16 %v435
    %v927 = vunpack.c.h.b16 %v435
    %v928 = vunpack.c.l.b16 %v436
    %v929 = vunpack.c.h.b16 %v436
    %v930 = vunpack.c.l.b16 %v437
    %v931 = vunpack.c.h.b16 %v437
    %v932 = vunpack.c.l.b16 %v438
    %v933 = vunpack.c.h.b16 %v438
    %v934 = vunpack.c.l.b16 %v439
    %v935 = vunpack.c.h.b16 %v439
    %v936 = vunpack.c.l.b16 %v440
    %v937 = vunpack.c.h.b16 %v440
    %v938 = vunpack.c.l.b16 %v441
    %v939 = vunpack.c.h.b16 %v441
    %v940 = vunpack.c.l.b16 %v442
    %v941 = vunpack.c.h.b16 %v442
    %v942 = vunpack.c.l.b16 %v443
    %v943 = vunpack.c.h.b16 %v443
    %v944 = vunpack.c.l.b16 %v444
    %v945 = vunpack.c.h.b16 %v444
    %v946 = vunpack.c.l.b16 %v445
    %v947 = vunpack.c.h.b16 %v445
    %v948 = vunpack.c.l.b16 %v446
    %v949 = vunpack.c.h.b16 %v446
    %v950 = vunpack.c.l.b16 %v447
    %v951 = vunpack.c.h.b16 %v447
    %v952 = vunpack.c.l.b16 %v448
    %v953 = vunpack.c.h.b16 %v448
    %v954 = vunpack.c.l.b16 %v449
    %v955 = vunpack.c.h.b16 %v449
    %v956 = vunpack.c.l.b16 %v450
    %v957 = vunpack.c.h.b16 %v450
    %v958 = vunpack.c.l.b16 %v451
    %v959 = vunpack.c.h.b16 %v451
    %v960 = vunpack.c.l.b16 %v452
    %v961 = vunpack.c.h.b16 %v452
    %v962 = vunpack.c.l.b16 %v453
    %v963 = vunpack.c.h.b16 %v453
    %v964 = vunpack.c.l.b16 %v454
    %v965 = vunpack.c.h.b16 %v454
    %v966 = vunpack.c.l.b16 %v455
    %v967 = vunpack.c.h.b16 %v455
    %v968 = vunpack.c.l.b16 %v456
    %v969 = vunpack.c.h.b16 %v456
    %v970 = vunpack.c.l.b16 %v457
    %v971 = vunpack.c.h.b16 %v457
    %v972 = vunpack.c.l.b16 %v458
    %v973 = vunpack.c.h.b16 %v458
    %v974 = vunpack.c.l.b16 %v459
    %v975 = vunpack.c.h.b16 %v459
    %v976 = vunpack.c.l.b16 %v460
    %v977 = vunpack.c.h.b16 %v460
    %v978 = vunpack.c.l.b16 %v461
    %v979 = vunpack.c.h.b16 %v461
    %v980 = vunpack.c.l.b16 %v462
    %v981 = vunpack.c.h.b16 %v462
    %v982 = vunpack.c.l.b16 %v463
    %v983 = vunpack.c.h.b16 %v463
    %v984 = vunpack.c.l.b16 %v464
    %v985 = vunpack.c.h.b16 %v464
    %v986 = vunpack.c.l.b16 %v465
    %v987 = vunpack.c.h.b16 %v465
    %v988 = vunpack.c.l.b16 %v466
    %v989 = vunpack.c.h.b16 %v466
    %v990 = vunpack.c.l.b16 %v467
    %v991 = vunpack.c.h.b16 %v467
    %v992 = vunpack.c.l.b16 %v468
    %v993 = vunpack.c.h.b16 %v468
    %v994 = vunpack.c.l.b16 %v469
    %v995 = vunpack.c.h.b16 %v469
    %v996 = vunpack.c.l.b16 %v470
    %v997 = vunpack.c.h.b16 %v470
    %v998 = vunpack.c.l.b16 %v471
    %v999 = vunpack.c.h.b16 %v471
    %v1000 = vunpack.c.l.b16 %v472
    %v1001 = vunpack.c.h.b16 %v472
    %v1002 = vunpack.c.l.b16 %v473
    %v1003 = vunpack.c.h.b16 %v473
    %v1004 = vunpack.c.l.b16 %v474
    %v1005 = vunpack.c.h.b16 %v474
    %v1006 = vunpack.c.l.b16 %v475
    %v1007 = vunpack.c.h.b16 %v475
    %v1008 = vunpack.c.l.b16 %v476
    %v1009 = vunpack.c.h.b16 %v476
    %v1010 = vunpack.c.l.b16 %v477
    %v1011 = vunpack.c.h.b16 %v477
    %v1012 = vunpack.c.l.b16 %v478
    %v1013 = vunpack.c.h.b16 %v478
    %v1014 = vunpack.c.l.b16 %v479
    %v1015 = vunpack.c.h.b16 %v479
    %v1016 = vunpack.c.l.b16 %v480
    %v1017 = vunpack.c.h.b16 %v480
    %v1018 = vunpack.c.l.b16 %v481
    %v1019 = vunpack.c.h.b16 %v481
    %v1020 = vunpack.c.l.b16 %v482
    %v1021 = vunpack.c.h.b16 %v482
    %v1022 = vunpack.c.l.b16 %v483
    %v1023 = vunpack.c.h.b16 %v483
    %v1024 = vunpack.c.l.b16 %v484
    %v1025 = vunpack.c.h.b16 %v484
    %v1026 = vunpack.c.l.b16 %v485
    %v1027 = vunpack.c.h.b16 %v485
    %v1028 = vunpack.c.l.b16 %v486
    %v1029 = vunpack.c.h.b16 %v486
    %v1030 = vunpack.c.l.b16 %v487
    %v1031 = vunpack.c.h.b16 %v487
    %v1032 = vunpack.c.l.b16 %v488
    %v1033 = vunpack.c.h.b16 %v488
    %v1034 = vunpack.c.l.b16 %v489
    %v1035 = vunpack.c.h.b16 %v489
    %v1036 = vunpack.c.l.b16 %v490
    %v1037 = vunpack.c.h.b16 %v490
    %v1038 = vunpack.c.l.b16 %v491
    %v1039 = vunpack.c.h.b16 %v491
    %v1040 = vunpack.c.l.b16 %v492
    %v1041 = vunpack.c.h.b16 %v492
    %v1042 = vunpack.c.l.b16 %v493
    %v1043 = vunpack.c.h.b16 %v493
    %v1044 = vunpack.c.l.b16 %v494
    %v1045 = vunpack.c.h.b16 %v494
    %v1046 = vunpack.c.l.b16 %v495
    %v1047 = vunpack.c.h.b16 %v495
    %v1048 = vunpack.c.l.b16 %v496
    %v1049 = vunpack.c.h.b16 %v496
    %v1050 = vunpack.c.l.b16 %v497
    %v1051 = vunpack.c.h.b16 %v497
    %v1052 = vunpack.c.l.b16 %v498
    %v1053 = vunpack.c.h.b16 %v498
    %v1054 = vunpack.c.l.b16 %v499
    %v1055 = vunpack.c.h.b16 %v499
    %v1056 = vunpack.c.l.b16 %v500
    %v1057 = vunpack.c.h.b16 %v500
    %v1058 = vunpack.c.l.b16 %v501
    %v1059 = vunpack.c.h.b16 %v501
    %v1060 = vunpack.c.l.b16 %v502
    %v1061 = vunpack.c.h.b16 %v502
    %v1062 = vunpack.c.l.b16 %v503
    %v1063 = vunpack.c.h.b16 %v503
    %v1064 = vunpack.c.l.b16 %v504
    %v1065 = vunpack.c.h.b16 %v504
    %v1066 = vunpack.c.l.b16 %v505
    %v1067 = vunpack.c.h.b16 %v505
    %v1068 = vunpack.c.l.b16 %v506
    %v1069 = vunpack.c.h.b16 %v506
    %v1070 = vunpack.c.l.b16 %v507
    %v1071 = vunpack.c.h.b16 %v507
    %v1072 = vunpack.c.l.b16 %v508
    %v1073 = vunpack.c.h.b16 %v508
    %v1074 = vunpack.c.l.b16 %v509
    %v1075 = vunpack.c.h.b16 %v509
    %v1076 = vunpack.c.l.b16 %v510
    %v1077 = vunpack.c.h.b16 %v510
    %v1078 = vunpack.c.l.b16 %v511
    %v1079 = vunpack.c.h.b16 %v511
    %v1080 = vunpack.c.l.b16 %v512
    %v1081 = vunpack.c.h.b16 %v512
    %v1082 = vunpack.c.l.b16 %v513
    %v1083 = vunpack.c.h.b16 %v513
    %v1084 = vunpack.c.l.b16 %v514
    %v1085 = vunpack.c.h.b16 %v514
    %v1086 = vunpack.c.l.b16 %v515
    %v1087 = vunpack.c.h.b16 %v515
    %v1088 = vunpack.c.l.b16 %v516
    %v1089 = vunpack.c.h.b16 %v516
    %v1090 = vunpack.c.l.b16 %v517
    %v1091 = vunpack.c.h.b16 %v517
    %v1092 = vunpack.c.l.b16 %v518
    %v1093 = vunpack.c.h.b16 %v518
    %v1094 = vunpack.c.l.b16 %v519
    %v1095 = vunpack.c.h.b16 %v519
    %v1096 = vunpack.c.l.b16 %v520
    %v1097 = vunpack.c.h.b16 %v520
    %v1098 = vunpack.c.l.b16 %v521
    %v1099 = vunpack.c.h.b16 %v521
    %v1100 = vunpack.c.l.b16 %v522
    %v1101 = vunpack.c.h.b16 %v522
    %v1102 = vunpack.c.l.b16 %v523
    %v1103 = vunpack.c.h.b16 %v523
    %v1104 = vunpack.c.l.b16 %v524
    %v1105 = vunpack.c.h.b16 %v524
    %v1106 = vunpack.c.l.b16 %v525
    %v1107 = vunpack.c.h.b16 %v525
    %v1108 = vunpack.c.l.b16 %v526
    %v1109 = vunpack.c.h.b16 %v526
    %v1110 = vunpack.c.l.b16 %v527
    %v1111 = vunpack.c.h.b16 %v527
    %v1112 = vunpack.c.l.b16 %v528
    %v1113 = vunpack.c.h.b16 %v528
    %v1114 = vunpack.c.l.b16 %v529
    %v1115 = vunpack.c.h.b16 %v529
    %v1116 = vunpack.c.l.b16 %v530
    %v1117 = vunpack.c.h.b16 %v530
    %v1118 = vunpack.c.l.b16 %v531
    %v1119 = vunpack.c.h.b16 %v531
    %v1120 = vunpack.c.l.b16 %v532
    %v1121 = vunpack.c.h.b16 %v532
    %v1122 = vunpack.c.l.b16 %v533
    %v1123 = vunpack.c.h.b16 %v533
    %v1124 = vunpack.c.l.b16 %v534
    %v1125 = vunpack.c.h.b16 %v534
    %v1126 = vunpack.c.l.b16 %v535
    %v1127 = vunpack.c.h.b16 %v535
    %v1128 = vunpack.c.l.b16 %v536
    %v1129 = vunpack.c.h.b16 %v536
    %v1130 = vunpack.c.l.b16 %v537
    %v1131 = vunpack.c.h.b16 %v537
    %v1132 = vunpack.c.l.b16 %v538
    %v1133 = vunpack.c.h.b16 %v538
    %v1134 = vunpack.c.l.b16 %v539
    %v1135 = vunpack.c.h.b16 %v539
    %v1136 = vunpack.c.l.b16 %v540
    %v1137 = vunpack.c.h.b16 %v540
    %v1138 = vunpack.c.l.b16 %v541
    %v1139 = vunpack.c.h.b16 %v541
    %v1140 = vunpack.c.l.b16 %v542
    %v1141 = vunpack.c.h.b16 %v542
    %v1142 = vunpack.c.l.b16 %v543
    %v1143 = vunpack.c.h.b16 %v543
    %v1144 = vpack.c.b16 %v748, %v744
    %v1145 = vpack.c.b16 %v749, %v745
    %v1146 = vpack.c.b16 %v750, %v746
    %v1147 = vpack.c.b16 %v751, %v747
    %v1148 = vpack.c.b16 %v756, %v752
    %v1149 = vpack.c.b16 %v757, %v753
    %v1150 = vpack.c.b16 %v758, %v754
    %v1151 = vpack.c.b16 %v759, %v755
    %v1152 = vpack.c.b16 %v764, %v760
    %v1153 = vpack.c.b16 %v765, %v761
    %v1154 = vpack.c.b16 %v766, %v762
    %v1155 = vpack.c.b16 %v767, %v763
    %v1156 = vpack.c.b16 %v772, %v768
    %v1157 = vpack.c.b16 %v773, %v769
    %v1158 = vpack.c.b16 %v774, %v770
    %v1159 = vpack.c.b16 %v775, %v771
    %v1160 = vpack.c.b16 %v780, %v776
    %v1161 = vpack.c.b16 %v781, %v777
    %v1162 = vpack.c.b16 %v782, %v778
    %v1163 = vpack.c.b16 %v783, %v779
    %v1164 = vpack.c.b16 %v788, %v784
    %v1165 = vpack.c.b16 %v789, %v785
    %v1166 = vpack.c.b16 %v790, %v786
    %v1167 = vpack.c.b16 %v791, %v787
    %v1168 = vpack.c.b16 %v796, %v792
    %v1169 = vpack.c.b16 %v797, %v793
    %v1170 = vpack.c.b16 %v798, %v794
    %v1171 = vpack.c.b16 %v799, %v795
    %v1172 = vpack.c.b16 %v804, %v800
    %v1173 = vpack.c.b16 %v805, %v801
    %v1174 = vpack.c.b16 %v806, %v802
    %v1175 = vpack.c.b16 %v807, %v803
    %v1176 = vpack.c.b16 %v812, %v808
    %v1177 = vpack.c.b16 %v813, %v809
    %v1178 = vpack.c.b16 %v814, %v810
    %v1179 = vpack.c.b16 %v815, %v811
    %v1180 = vpack.c.b16 %v820, %v816
    %v1181 = vpack.c.b16 %v821, %v817
    %v1182 = vpack.c.b16 %v822, %v818
    %v1183 = vpack.c.b16 %v823, %v819
    %v1184 = vpack.c.b16 %v828, %v824
    %v1185 = vpack.c.b16 %v829, %v825
    %v1186 = vpack.c.b16 %v830, %v826
    %v1187 = vpack.c.b16 %v831, %v827
    %v1188 = vpack.c.b16 %v836, %v832
    %v1189 = vpack.c.b16 %v837, %v833
    %v1190 = vpack.c.b16 %v838, %v834
    %v1191 = vpack.c.b16 %v839, %v835
    %v1192 = vpack.c.b16 %v844, %v840
    %v1193 = vpack.c.b16 %v845, %v841
    %v1194 = vpack.c.b16 %v846, %v842
    %v1195 = vpack.c.b16 %v847, %v843
    %v1196 = vpack.c.b16 %v852, %v848
    %v1197 = vpack.c.b16 %v853, %v849
    %v1198 = vpack.c.b16 %v854, %v850
    %v1199 = vpack.c.b16 %v855, %v851
    %v1200 = vpack.c.b16 %v860, %v856
    %v1201 = vpack.c.b16 %v861, %v857
    %v1202 = vpack.c.b16 %v862, %v858
    %v1203 = vpack.c.b16 %v863, %v859
    %v1204 = vpack.c.b16 %v868, %v864
    %v1205 = vpack.c.b16 %v869, %v865
    %v1206 = vpack.c.b16 %v870, %v866
    %v1207 = vpack.c.b16 %v871, %v867
    %v1208 = vpack.c.b16 %v876, %v872
    %v1209 = vpack.c.b16 %v877, %v873
    %v1210 = vpack.c.b16 %v878, %v874
    %v1211 = vpack.c.b16 %v879, %v875
    %v1212 = vpack.c.b16 %v884, %v880
    %v1213 = vpack.c.b16 %v885, %v881
    %v1214 = vpack.c.b16 %v886, %v882
    %v1215 = vpack.c.b16 %v887, %v883
    %v1216 = vpack.c.b16 %v892, %v888
    %v1217 = vpack.c.b16 %v893, %v889
    %v1218 = vpack.c.b16 %v894, %v890
    %v1219 = vpack.c.b16 %v895, %v891
    %v1220 = vpack.c.b16 %v900, %v896
    %v1221 = vpack.c.b16 %v901, %v897
    %v1222 = vpack.c.b16 %v902, %v898
    %v1223 = vpack.c.b16 %v903, %v899
    %v1224 = vpack.c.b16 %v908, %v904
    %v1225 = vpack.c.b16 %v909, %v905
    %v1226 = vpack.c.b16 %v910, %v906
    %v1227 = vpack.c.b16 %v911, %v907
    %v1228 = vpack.c.b16 %v916, %v912
    %v1229 = vpack.c.b16 %v917, %v913
    %v1230 = vpack.c.b16 %v918, %v914
    %v1231 = vpack.c.b16 %v919, %v915
    %v1232 = vpack.c.b16 %v924, %v920
    %v1233 = vpack.c.b16 %v925, %v921
    %v1234 = vpack.c.b16 %v926, %v922
    %v1235 = vpack.c.b16 %v927, %v923
    %v1236 = vpack.c.b16 %v932, %v928
    %v1237 = vpack.c.b16 %v933, %v929
    %v1238 = vpack.c.b16 %v934, %v930
    %v1239 = vpack.c.b16 %v935, %v931
    %v1240 = vpack.c.b16 %v940, %v936
    %v1241 = vpack.c.b16 %v941, %v937
    %v1242 = vpack.c.b16 %v942, %v938
    %v1243 = vpack.c.b16 %v943, %v939
    %v1244 = vpack.c.b16 %v948, %v944
    %v1245 = vpack.c.b16 %v949, %v945
    %v1246 = vpack.c.b16 %v950, %v946
    %v1247 = vpack.c.b16 %v951, %v947
    %v1248 = vpack.c.b16 %v956, %v952
    %v1249 = vpack.c.b16 %v957, %v953
    %v1250 = vpack.c.b16 %v958, %v954
    %v1251 = vpack.c.b16 %v959, %v955
    %v1252 = vpack.c.b16 %v964, %v960
    %v1253 = vpack.c.b16 %v965, %v961
    %v1254 = vpack.c.b16 %v966, %v962
    %v1255 = vpack.c.b16 %v967, %v963
    %v1256 = vpack.c.b16 %v972, %v968
    %v1257 = vpack.c.b16 %v973, %v969
    %v1258 = vpack.c.b16 %v974, %v970
    %v1259 = vpack.c.b16 %v975, %v971
    %v1260 = vpack.c.b16 %v980, %v976
    %v1261 = vpack.c.b16 %v981, %v977
    %v1262 = vpack.c.b16 %v982, %v978
    %v1263 = vpack.c.b16 %v983, %v979
    %v1264 = vpack.c.b16 %v988, %v984
    %v1265 = vpack.c.b16 %v989, %v985
    %v1266 = vpack.c.b16 %v990, %v986
    %v1267 = vpack.c.b16 %v991, %v987
    %v1268 = vpack.c.b16 %v996, %v992
    %v1269 = vpack.c.b16 %v997, %v993
    %v1270 = vpack.c.b16 %v998, %v994
    %v1271 = vpack.c.b16 %v999, %v995
    %v1272 = vpack.c.b16 %v1004, %v1000
    %v1273 = vpack.c.b16 %v1005, %v1001
    %v1274 = vpack.c.b16 %v1006, %v1002
    %v1275 = vpack.c.b16 %v1007, %v1003
    %v1276 = vpack.c.b16 %v1012, %v1008
    %v1277 = vpack.c.b16 %v1013, %v1009
    %v1278 = vpack.c.b16 %v1014, %v1010
    %v1279 = vpack.c.b16 %v1015, %v1011
    %v1280 = vpack.c.b16 %v1020, %v1016
    %v1281 = vpack.c.b16 %v1021, %v1017
    %v1282 = vpack.c.b16 %v1022, %v1018
    %v1283 = vpack.c.b16 %v1023, %v1019
    %v1284 = vpack.c.b16 %v1028, %v1024
    %v1285 = vpack.c.b16 %v1029, %v1025
    %v1286 = vpack.c.b16 %v1030, %v1026
    %v1287 = vpack.c.b16 %v1031, %v1027
    %v1288 = vpack.c.b16 %v1036, %v1032
    %v1289 = vpack.c.b16 %v1037, %v1033
    %v1290 = vpack.c.b16 %v1038, %v1034
    %v1291 = vpack.c.b16 %v1039, %v1035
    %v1292 = vpack.c.b16 %v1044, %v1040
    %v1293 = vpack.c.b16 %v1045, %v1041
    %v1294 = vpack.c.b16 %v1046, %v1042
    %v1295 = vpack.c.b16 %v1047, %v1043
    %v1296 = vpack.c.b16 %v1052, %v1048
    %v1297 = vpack.c.b16 %v1053, %v1049
    %v1298 = vpack.c.b16 %v1054, %v1050
    %v1299 = vpack.c.b16 %v1055, %v1051
    %v1300 = vpack.c.b16 %v1060, %v1056
    %v1301 = vpack.c.b16 %v1061, %v1057
    %v1302 = vpack.c.b16 %v1062, %v1058
    %v1303 = vpack.c.b16 %v1063, %v1059
    %v1304 = vpack.c.b16 %v1068, %v1064
    %v1305 = vpack.c.b16 %v1069, %v1065
    %v1306 = vpack.c.b16 %v1070, %v1066
    %v1307 = vpack.c.b16 %v1071, %v1067
    %v1308 = vpack.c.b16 %v1076, %v1072
    %v1309 = vpack.c.b16 %v1077, %v1073
    %v1310 = vpack.c.b16 %v1078, %v1074
    %v1311 = vpack.c.b16 %v1079, %v1075
    %v1312 = vpack.c.b16 %v1084, %v1080
    %v1313 = vpack.c.b16 %v1085, %v1081
    %v1314 = vpack.c.b16 %v1086, %v1082
    %v1315 = vpack.c.b16 %v1087, %v1083
    %v1316 = vpack.c.b16 %v1092, %v1088
    %v1317 = vpack.c.b16 %v1093, %v1089
    %v1318 = vpack.c.b16 %v1094, %v1090
    %v1319 = vpack.c.b16 %v1095, %v1091
    %v1320 = vpack.c.b16 %v1100, %v1096
    %v1321 = vpack.c.b16 %v1101, %v1097
    %v1322 = vpack.c.b16 %v1102, %v1098
    %v1323 = vpack.c.b16 %v1103, %v1099
    %v1324 = vpack.c.b16 %v1108, %v1104
    %v1325 = vpack.c.b16 %v1109, %v1105
    %v1326 = vpack.c.b16 %v1110, %v1106
    %v1327 = vpack.c.b16 %v1111, %v1107
    %v1328 = vpack.c.b16 %v1116, %v1112
    %v1329 = vpack.c.b16 %v1117, %v1113
    %v1330 = vpack.c.b16 %v1118, %v1114
    %v1331 = vpack.c.b16 %v1119, %v1115
    %v1332 = vpack.c.b16 %v1124, %v1120
    %v1333 = vpack.c.b16 %v1125, %v1121
    %v1334 = vpack.c.b16 %v1126, %v1122
    %v1335 = vpack.c.b16 %v1127, %v1123
    %v1336 = vpack.c.b16 %v1132, %v1128
    %v1337 = vpack.c.b16 %v1133, %v1129
    %v1338 = vpack.c.b16 %v1134, %v1130
    %v1339 = vpack.c.b16 %v1135, %v1131
    %v1340 = vpack.c.b16 %v1140, %v1136
    %v1341 = vpack.c.b16 %v1141, %v1137
    %v1342 = vpack.c.b16 %v1142, %v1138
    %v1343 = vpack.c.b16 %v1143, %v1139
    %vm1544 = vcmask 261120
    %v1546 = vsel %vm1544, %v143, 0
    %1548 = vmatpush.bf16.msra.mxu0 %v1172
    %1549 = vmatpush.bf16.msra.mxu0 %v1168
    %1550 = vmatpush.bf16.msra.mxu0 %v1164
    %1551 = vmatpush.bf16.msra.mxu0 %v1160
    %1552 = vmatpush.bf16.msra.mxu0 %v1156
    %1553 = vmatpush.bf16.msra.mxu0 %v1152
    %1554 = vmatpush.bf16.msra.mxu0 %v1148
    %1555 = vmatpush.bf16.msra.mxu0 %v1144
    %1556 = vmatmul.bf16.gmra.mxu0 %v137
    %v1557 = vpop.f32.mrf.mxu0
    %v1558 = vadd.f32 0.0, %v1557
    %v1559 = vpop.f32.mrf.mxu0
    %1560 = vdwg.mxu0
    %1561 = vmatpush.bf16.msra.mxu0 %v1204
    %1562 = vmatpush.bf16.msra.mxu0 %v1200
    %1563 = vmatpush.bf16.msra.mxu0 %v1196
    %1564 = vmatpush.bf16.msra.mxu0 %v1192
    %1565 = vmatpush.bf16.msra.mxu0 %v1188
    %1566 = vmatpush.bf16.msra.mxu0 %v1184
    %1567 = vmatpush.bf16.msra.mxu0 %v1180
    %1568 = vmatpush.bf16.msra.mxu0 %v1176
    %1569 = vmatmul.bf16.gmra.mxu0 %v138
    %v1570 = vpop.f32.mrf.mxu0
    %v1571 = vadd.f32 %v1558, %v1570
    %v1572 = vpop.f32.mrf.mxu0
    %1573 = vdwg.mxu0
    %1574 = vmatpush.bf16.msra.mxu0 %v1236
    %1575 = vmatpush.bf16.msra.mxu0 %v1232
    %1576 = vmatpush.bf16.msra.mxu0 %v1228
    %1577 = vmatpush.bf16.msra.mxu0 %v1224
    %1578 = vmatpush.bf16.msra.mxu0 %v1220
    %1579 = vmatpush.bf16.msra.mxu0 %v1216
    %1580 = vmatpush.bf16.msra.mxu0 %v1212
    %1581 = vmatpush.bf16.msra.mxu0 %v1208
    %1582 = vmatmul.bf16.gmra.mxu0 %v139
    %v1583 = vpop.f32.mrf.mxu0
    %v1584 = vadd.f32 %v1571, %v1583
    %v1585 = vpop.f32.mrf.mxu0
    %1586 = vdwg.mxu0
    %1587 = vmatpush.bf16.msra.mxu0 %v1268
    %1588 = vmatpush.bf16.msra.mxu0 %v1264
    %1589 = vmatpush.bf16.msra.mxu0 %v1260
    %1590 = vmatpush.bf16.msra.mxu0 %v1256
    %1591 = vmatpush.bf16.msra.mxu0 %v1252
    %1592 = vmatpush.bf16.msra.mxu0 %v1248
    %1593 = vmatpush.bf16.msra.mxu0 %v1244
    %1594 = vmatpush.bf16.msra.mxu0 %v1240
    %1595 = vmatmul.bf16.gmra.mxu0 %v140
    %v1596 = vpop.f32.mrf.mxu0
    %v1597 = vadd.f32 %v1584, %v1596
    %v1598 = vpop.f32.mrf.mxu0
    %1599 = vdwg.mxu0
    %1600 = vmatpush.bf16.msra.mxu0 %v1300
    %1601 = vmatpush.bf16.msra.mxu0 %v1296
    %1602 = vmatpush.bf16.msra.mxu0 %v1292
    %1603 = vmatpush.bf16.msra.mxu0 %v1288
    %1604 = vmatpush.bf16.msra.mxu0 %v1284
    %1605 = vmatpush.bf16.msra.mxu0 %v1280
    %1606 = vmatpush.bf16.msra.mxu0 %v1276
    %1607 = vmatpush.bf16.msra.mxu0 %v1272
    %1608 = vmatmul.bf16.gmra.mxu0 %v141
    %v1609 = vpop.f32.mrf.mxu0
    %v1610 = vadd.f32 %v1597, %v1609
    %v1611 = vpop.f32.mrf.mxu0
    %1612 = vdwg.mxu0
    %1613 = vmatpush.bf16.msra.mxu0 %v1332
    %1614 = vmatpush.bf16.msra.mxu0 %v1328
    %1615 = vmatpush.bf16.msra.mxu0 %v1324
    %1616 = vmatpush.bf16.msra.mxu0 %v1320
    %1617 = vmatpush.bf16.msra.mxu0 %v1316
    %1618 = vmatpush.bf16.msra.mxu0 %v1312
    %1619 = vmatpush.bf16.msra.mxu0 %v1308
    %1620 = vmatpush.bf16.msra.mxu0 %v1304
    %1621 = vmatmul.bf16.gmra.mxu0 %v142
    %v1622 = vpop.f32.mrf.mxu0
    %v1623 = vadd.f32 %v1610, %v1622
    %v1624 = vpop.f32.mrf.mxu0
    %1625 = vdwg.mxu0
    %1626 = vmatpush.bf16.msra.mxu0 0
    %1627 = vmatpush.bf16.msra.mxu0 0
    %1628 = vmatpush.bf16.msra.mxu0 0
    %1629 = vmatpush.bf16.msra.mxu0 0
    %1630 = vmatpush.bf16.msra.mxu0 0
    %1631 = vmatpush.bf16.msra.mxu0 0
    %1632 = vmatpush.bf16.msra.mxu0 %v1340
    %1633 = vmatpush.bf16.msra.mxu0 %v1336
    %1634 = vmatmul.bf16.gmra.mxu0 %v1546
    %v1635 = vpop.f32.mrf.mxu0
    %v1636 = vadd.f32 %v1623, %v1635
    %v1637 = vpop.f32.mrf.mxu0
    %1638 = vdwg.mxu0
    %1639 = vmatpush.bf16.msra.mxu0 %v1173
    %1640 = vmatpush.bf16.msra.mxu0 %v1169
    %1641 = vmatpush.bf16.msra.mxu0 %v1165
    %1642 = vmatpush.bf16.msra.mxu0 %v1161
    %1643 = vmatpush.bf16.msra.mxu0 %v1157
    %1644 = vmatpush.bf16.msra.mxu0 %v1153
    %1645 = vmatpush.bf16.msra.mxu0 %v1149
    %1646 = vmatpush.bf16.msra.mxu0 %v1145
    %1647 = vmatmul.bf16.gmra.mxu0 %v137
    %v1648 = vpop.f32.mrf.mxu0
    %v1649 = vadd.f32 0.0, %v1648
    %v1650 = vpop.f32.mrf.mxu0
    %1651 = vdwg.mxu0
    %1652 = vmatpush.bf16.msra.mxu0 %v1205
    %1653 = vmatpush.bf16.msra.mxu0 %v1201
    %1654 = vmatpush.bf16.msra.mxu0 %v1197
    %1655 = vmatpush.bf16.msra.mxu0 %v1193
    %1656 = vmatpush.bf16.msra.mxu0 %v1189
    %1657 = vmatpush.bf16.msra.mxu0 %v1185
    %1658 = vmatpush.bf16.msra.mxu0 %v1181
    %1659 = vmatpush.bf16.msra.mxu0 %v1177
    %1660 = vmatmul.bf16.gmra.mxu0 %v138
    %v1661 = vpop.f32.mrf.mxu0
    %v1662 = vadd.f32 %v1649, %v1661
    %v1663 = vpop.f32.mrf.mxu0
    %1664 = vdwg.mxu0
    %1665 = vmatpush.bf16.msra.mxu0 %v1237
    %1666 = vmatpush.bf16.msra.mxu0 %v1233
    %1667 = vmatpush.bf16.msra.mxu0 %v1229
    %1668 = vmatpush.bf16.msra.mxu0 %v1225
    %1669 = vmatpush.bf16.msra.mxu0 %v1221
    %1670 = vmatpush.bf16.msra.mxu0 %v1217
    %1671 = vmatpush.bf16.msra.mxu0 %v1213
    %1672 = vmatpush.bf16.msra.mxu0 %v1209
    %1673 = vmatmul.bf16.gmra.mxu0 %v139
    %v1674 = vpop.f32.mrf.mxu0
    %v1675 = vadd.f32 %v1662, %v1674
    %v1676 = vpop.f32.mrf.mxu0
    %1677 = vdwg.mxu0
    %1678 = vmatpush.bf16.msra.mxu0 %v1269
    %1679 = vmatpush.bf16.msra.mxu0 %v1265
    %1680 = vmatpush.bf16.msra.mxu0 %v1261
    %1681 = vmatpush.bf16.msra.mxu0 %v1257
    %1682 = vmatpush.bf16.msra.mxu0 %v1253
    %1683 = vmatpush.bf16.msra.mxu0 %v1249
    %1684 = vmatpush.bf16.msra.mxu0 %v1245
    %1685 = vmatpush.bf16.msra.mxu0 %v1241
    %1686 = vmatmul.bf16.gmra.mxu0 %v140
    %v1687 = vpop.f32.mrf.mxu0
    %v1688 = vadd.f32 %v1675, %v1687
    %v1689 = vpop.f32.mrf.mxu0
    %1690 = vdwg.mxu0
    %1691 = vmatpush.bf16.msra.mxu0 %v1301
    %1692 = vmatpush.bf16.msra.mxu0 %v1297
    %1693 = vmatpush.bf16.msra.mxu0 %v1293
    %1694 = vmatpush.bf16.msra.mxu0 %v1289
    %1695 = vmatpush.bf16.msra.mxu0 %v1285
    %1696 = vmatpush.bf16.msra.mxu0 %v1281
    %1697 = vmatpush.bf16.msra.mxu0 %v1277
    %1698 = vmatpush.bf16.msra.mxu0 %v1273
    %1699 = vmatmul.bf16.gmra.mxu0 %v141
    %v1700 = vpop.f32.mrf.mxu0
    %v1701 = vadd.f32 %v1688, %v1700
    %v1702 = vpop.f32.mrf.mxu0
    %1703 = vdwg.mxu0
    %1704 = vmatpush.bf16.msra.mxu0 %v1333
    %1705 = vmatpush.bf16.msra.mxu0 %v1329
    %1706 = vmatpush.bf16.msra.mxu0 %v1325
    %1707 = vmatpush.bf16.msra.mxu0 %v1321
    %1708 = vmatpush.bf16.msra.mxu0 %v1317
    %1709 = vmatpush.bf16.msra.mxu0 %v1313
    %1710 = vmatpush.bf16.msra.mxu0 %v1309
    %1711 = vmatpush.bf16.msra.mxu0 %v1305
    %1712 = vmatmul.bf16.gmra.mxu0 %v142
    %v1713 = vpop.f32.mrf.mxu0
    %v1714 = vadd.f32 %v1701, %v1713
    %v1715 = vpop.f32.mrf.mxu0
    %1716 = vdwg.mxu0
    %1717 = vmatpush.bf16.msra.mxu0 0
    %1718 = vmatpush.bf16.msra.mxu0 0
    %1719 = vmatpush.bf16.msra.mxu0 0
    %1720 = vmatpush.bf16.msra.mxu0 0
    %1721 = vmatpush.bf16.msra.mxu0 0
    %1722 = vmatpush.bf16.msra.mxu0 0
    %1723 = vmatpush.bf16.msra.mxu0 %v1341
    %1724 = vmatpush.bf16.msra.mxu0 %v1337
    %1725 = vmatmul.bf16.gmra.mxu0 %v1546
    %v1726 = vpop.f32.mrf.mxu0
    %v1727 = vadd.f32 %v1714, %v1726
    %v1728 = vpop.f32.mrf.mxu0
    %1729 = vdwg.mxu0
    %1730 = vmatpush.bf16.msra.mxu0 %v1174
    %1731 = vmatpush.bf16.msra.mxu0 %v1170
    %1732 = vmatpush.bf16.msra.mxu0 %v1166
    %1733 = vmatpush.bf16.msra.mxu0 %v1162
    %1734 = vmatpush.bf16.msra.mxu0 %v1158
    %1735 = vmatpush.bf16.msra.mxu0 %v1154
    %1736 = vmatpush.bf16.msra.mxu0 %v1150
    %1737 = vmatpush.bf16.msra.mxu0 %v1146
    %1738 = vmatmul.bf16.gmra.mxu0 %v137
    %v1739 = vpop.f32.mrf.mxu0
    %v1740 = vadd.f32 0.0, %v1739
    %v1741 = vpop.f32.mrf.mxu0
    %1742 = vdwg.mxu0
    %1743 = vmatpush.bf16.msra.mxu0 %v1206
    %1744 = vmatpush.bf16.msra.mxu0 %v1202
    %1745 = vmatpush.bf16.msra.mxu0 %v1198
    %1746 = vmatpush.bf16.msra.mxu0 %v1194
    %1747 = vmatpush.bf16.msra.mxu0 %v1190
    %1748 = vmatpush.bf16.msra.mxu0 %v1186
    %1749 = vmatpush.bf16.msra.mxu0 %v1182
    %1750 = vmatpush.bf16.msra.mxu0 %v1178
    %1751 = vmatmul.bf16.gmra.mxu0 %v138
    %v1752 = vpop.f32.mrf.mxu0
    %v1753 = vadd.f32 %v1740, %v1752
    %v1754 = vpop.f32.mrf.mxu0
    %1755 = vdwg.mxu0
    %1756 = vmatpush.bf16.msra.mxu0 %v1238
    %1757 = vmatpush.bf16.msra.mxu0 %v1234
    %1758 = vmatpush.bf16.msra.mxu0 %v1230
    %1759 = vmatpush.bf16.msra.mxu0 %v1226
    %1760 = vmatpush.bf16.msra.mxu0 %v1222
    %1761 = vmatpush.bf16.msra.mxu0 %v1218
    %1762 = vmatpush.bf16.msra.mxu0 %v1214
    %1763 = vmatpush.bf16.msra.mxu0 %v1210
    %1764 = vmatmul.bf16.gmra.mxu0 %v139
    %v1765 = vpop.f32.mrf.mxu0
    %v1766 = vadd.f32 %v1753, %v1765
    %v1767 = vpop.f32.mrf.mxu0
    %1768 = vdwg.mxu0
    %1769 = vmatpush.bf16.msra.mxu0 %v1270
    %1770 = vmatpush.bf16.msra.mxu0 %v1266
    %1771 = vmatpush.bf16.msra.mxu0 %v1262
    %1772 = vmatpush.bf16.msra.mxu0 %v1258
    %1773 = vmatpush.bf16.msra.mxu0 %v1254
    %1774 = vmatpush.bf16.msra.mxu0 %v1250
    %1775 = vmatpush.bf16.msra.mxu0 %v1246
    %1776 = vmatpush.bf16.msra.mxu0 %v1242
    %1777 = vmatmul.bf16.gmra.mxu0 %v140
    %v1778 = vpop.f32.mrf.mxu0
    %v1779 = vadd.f32 %v1766, %v1778
    %v1780 = vpop.f32.mrf.mxu0
    %1781 = vdwg.mxu0
    %1782 = vmatpush.bf16.msra.mxu0 %v1302
    %1783 = vmatpush.bf16.msra.mxu0 %v1298
    %1784 = vmatpush.bf16.msra.mxu0 %v1294
    %1785 = vmatpush.bf16.msra.mxu0 %v1290
    %1786 = vmatpush.bf16.msra.mxu0 %v1286
    %1787 = vmatpush.bf16.msra.mxu0 %v1282
    %1788 = vmatpush.bf16.msra.mxu0 %v1278
    %1789 = vmatpush.bf16.msra.mxu0 %v1274
    %1790 = vmatmul.bf16.gmra.mxu0 %v141
    %v1791 = vpop.f32.mrf.mxu0
    %v1792 = vadd.f32 %v1779, %v1791
    %v1793 = vpop.f32.mrf.mxu0
    %1794 = vdwg.mxu0
    %1795 = vmatpush.bf16.msra.mxu0 %v1334
    %1796 = vmatpush.bf16.msra.mxu0 %v1330
    %1797 = vmatpush.bf16.msra.mxu0 %v1326
    %1798 = vmatpush.bf16.msra.mxu0 %v1322
    %1799 = vmatpush.bf16.msra.mxu0 %v1318
    %1800 = vmatpush.bf16.msra.mxu0 %v1314
    %1801 = vmatpush.bf16.msra.mxu0 %v1310
    %1802 = vmatpush.bf16.msra.mxu0 %v1306
    %1803 = vmatmul.bf16.gmra.mxu0 %v142
    %v1804 = vpop.f32.mrf.mxu0
    %v1805 = vadd.f32 %v1792, %v1804
    %v1806 = vpop.f32.mrf.mxu0
    %1807 = vdwg.mxu0
    %1808 = vmatpush.bf16.msra.mxu0 0
    %1809 = vmatpush.bf16.msra.mxu0 0
    %1810 = vmatpush.bf16.msra.mxu0 0
    %1811 = vmatpush.bf16.msra.mxu0 0
    %1812 = vmatpush.bf16.msra.mxu0 0
    %1813 = vmatpush.bf16.msra.mxu0 0
    %1814 = vmatpush.bf16.msra.mxu0 %v1342
    %1815 = vmatpush.bf16.msra.mxu0 %v1338
    %1816 = vmatmul.bf16.gmra.mxu0 %v1546
    %v1817 = vpop.f32.mrf.mxu0
    %v1818 = vadd.f32 %v1805, %v1817
    %v1819 = vpop.f32.mrf.mxu0
    %1820 = vdwg.mxu0
    %1821 = vmatpush.bf16.msra.mxu0 %v1175
    %1822 = vmatpush.bf16.msra.mxu0 %v1171
    %1823 = vmatpush.bf16.msra.mxu0 %v1167
    %1824 = vmatpush.bf16.msra.mxu0 %v1163
    %1825 = vmatpush.bf16.msra.mxu0 %v1159
    %1826 = vmatpush.bf16.msra.mxu0 %v1155
    %1827 = vmatpush.bf16.msra.mxu0 %v1151
    %1828 = vmatpush.bf16.msra.mxu0 %v1147
    %1829 = vmatmul.bf16.gmra.mxu0 %v137
    %v1830 = vpop.f32.mrf.mxu0
    %v1831 = vadd.f32 0.0, %v1830
    %v1832 = vpop.f32.mrf.mxu0
    %1833 = vdwg.mxu0
    %1834 = vmatpush.bf16.msra.mxu0 %v1207
    %1835 = vmatpush.bf16.msra.mxu0 %v1203
    %1836 = vmatpush.bf16.msra.mxu0 %v1199
    %1837 = vmatpush.bf16.msra.mxu0 %v1195
    %1838 = vmatpush.bf16.msra.mxu0 %v1191
    %1839 = vmatpush.bf16.msra.mxu0 %v1187
    %1840 = vmatpush.bf16.msra.mxu0 %v1183
    %1841 = vmatpush.bf16.msra.mxu0 %v1179
    %1842 = vmatmul.bf16.gmra.mxu0 %v138
    %v1843 = vpop.f32.mrf.mxu0
    %v1844 = vadd.f32 %v1831, %v1843
    %v1845 = vpop.f32.mrf.mxu0
    %1846 = vdwg.mxu0
    %1847 = vmatpush.bf16.msra.mxu0 %v1239
    %1848 = vmatpush.bf16.msra.mxu0 %v1235
    %1849 = vmatpush.bf16.msra.mxu0 %v1231
    %1850 = vmatpush.bf16.msra.mxu0 %v1227
    %1851 = vmatpush.bf16.msra.mxu0 %v1223
    %1852 = vmatpush.bf16.msra.mxu0 %v1219
    %1853 = vmatpush.bf16.msra.mxu0 %v1215
    %1854 = vmatpush.bf16.msra.mxu0 %v1211
    %1855 = vmatmul.bf16.gmra.mxu0 %v139
    %v1856 = vpop.f32.mrf.mxu0
    %v1857 = vadd.f32 %v1844, %v1856
    %v1858 = vpop.f32.mrf.mxu0
    %1859 = vdwg.mxu0
    %1860 = vmatpush.bf16.msra.mxu0 %v1271
    %1861 = vmatpush.bf16.msra.mxu0 %v1267
    %1862 = vmatpush.bf16.msra.mxu0 %v1263
    %1863 = vmatpush.bf16.msra.mxu0 %v1259
    %1864 = vmatpush.bf16.msra.mxu0 %v1255
    %1865 = vmatpush.bf16.msra.mxu0 %v1251
    %1866 = vmatpush.bf16.msra.mxu0 %v1247
    %1867 = vmatpush.bf16.msra.mxu0 %v1243
    %1868 = vmatmul.bf16.gmra.mxu0 %v140
    %v1869 = vpop.f32.mrf.mxu0
    %v1870 = vadd.f32 %v1857, %v1869
    %v1871 = vpop.f32.mrf.mxu0
    %1872 = vdwg.mxu0
    %1873 = vmatpush.bf16.msra.mxu0 %v1303
    %1874 = vmatpush.bf16.msra.mxu0 %v1299
    %1875 = vmatpush.bf16.msra.mxu0 %v1295
    %1876 = vmatpush.bf16.msra.mxu0 %v1291
    %1877 = vmatpush.bf16.msra.mxu0 %v1287
    %1878 = vmatpush.bf16.msra.mxu0 %v1283
    %1879 = vmatpush.bf16.msra.mxu0 %v1279
    %1880 = vmatpush.bf16.msra.mxu0 %v1275
    %1881 = vmatmul.bf16.gmra.mxu0 %v141
    %v1882 = vpop.f32.mrf.mxu0
    %v1883 = vadd.f32 %v1870, %v1882
    %v1884 = vpop.f32.mrf.mxu0
    %1885 = vdwg.mxu0
    %1886 = vmatpush.bf16.msra.mxu0 %v1335
    %1887 = vmatpush.bf16.msra.mxu0 %v1331
    %1888 = vmatpush.bf16.msra.mxu0 %v1327
    %1889 = vmatpush.bf16.msra.mxu0 %v1323
    %1890 = vmatpush.bf16.msra.mxu0 %v1319
    %1891 = vmatpush.bf16.msra.mxu0 %v1315
    %1892 = vmatpush.bf16.msra.mxu0 %v1311
    %1893 = vmatpush.bf16.msra.mxu0 %v1307
    %1894 = vmatmul.bf16.gmra.mxu0 %v142
    %v1895 = vpop.f32.mrf.mxu0
    %v1896 = vadd.f32 %v1883, %v1895
    %v1897 = vpop.f32.mrf.mxu0
    %1898 = vdwg.mxu0
    %1899 = vmatpush.bf16.msra.mxu0 0
    %1900 = vmatpush.bf16.msra.mxu0 0
    %1901 = vmatpush.bf16.msra.mxu0 0
    %1902 = vmatpush.bf16.msra.mxu0 0
    %1903 = vmatpush.bf16.msra.mxu0 0
    %1904 = vmatpush.bf16.msra.mxu0 0
    %1905 = vmatpush.bf16.msra.mxu0 %v1343
    %1906 = vmatpush.bf16.msra.mxu0 %v1339
    %1907 = vmatmul.bf16.gmra.mxu0 %v1546
    %v1908 = vpop.f32.mrf.mxu0
    %v1909 = vadd.f32 %v1896, %v1908
    %v1910 = vpop.f32.mrf.mxu0
    %1911 = vdwg.mxu0
    %v2112 = vunpack.c.l.b16 %v144
    %v2113 = vunpack.c.h.b16 %v144
    %v2114 = vunpack.c.l.b16 %v145
    %v2115 = vunpack.c.h.b16 %v145
    %v2116 = vunpack.c.l.b16 %v146
    %v2117 = vunpack.c.h.b16 %v146
    %v2118 = vunpack.c.l.b16 %v147
    %v2119 = vunpack.c.h.b16 %v147
    %v2120 = vunpack.c.l.b16 %v148
    %v2121 = vunpack.c.h.b16 %v148
    %v2122 = vunpack.c.l.b16 %v149
    %v2123 = vunpack.c.h.b16 %v149
    %v2124 = vunpack.c.l.b16 %v150
    %v2125 = vunpack.c.h.b16 %v150
    %v2126 = vunpack.c.l.b16 %v151
    %v2127 = vunpack.c.h.b16 %v151
    %v2128 = vunpack.c.l.b16 %v152
    %v2129 = vunpack.c.h.b16 %v152
    %v2130 = vunpack.c.l.b16 %v153
    %v2131 = vunpack.c.h.b16 %v153
    %v2132 = vunpack.c.l.b16 %v154
    %v2133 = vunpack.c.h.b16 %v154
    %v2134 = vunpack.c.l.b16 %v155
    %v2135 = vunpack.c.h.b16 %v155
    %v2136 = vunpack.c.l.b16 %v156
    %v2137 = vunpack.c.h.b16 %v156
    %v2138 = vunpack.c.l.b16 %v157
    %v2139 = vunpack.c.h.b16 %v157
    %v2140 = vunpack.c.l.b16 %v158
    %v2141 = vunpack.c.h.b16 %v158
    %v2142 = vunpack.c.l.b16 %v159
    %v2143 = vunpack.c.h.b16 %v159
    %v2144 = vunpack.c.l.b16 %v160
    %v2145 = vunpack.c.h.b16 %v160
    %v2146 = vunpack.c.l.b16 %v161
    %v2147 = vunpack.c.h.b16 %v161
    %v2148 = vunpack.c.l.b16 %v162
    %v2149 = vunpack.c.h.b16 %v162
    %v2150 = vunpack.c.l.b16 %v163
    %v2151 = vunpack.c.h.b16 %v163
    %v2152 = vunpack.c.l.b16 %v164
    %v2153 = vunpack.c.h.b16 %v164
    %v2154 = vunpack.c.l.b16 %v165
    %v2155 = vunpack.c.h.b16 %v165
    %v2156 = vunpack.c.l.b16 %v166
    %v2157 = vunpack.c.h.b16 %v166
    %v2158 = vunpack.c.l.b16 %v167
    %v2159 = vunpack.c.h.b16 %v167
    %v2160 = vunpack.c.l.b16 %v168
    %v2161 = vunpack.c.h.b16 %v168
    %v2162 = vunpack.c.l.b16 %v169
    %v2163 = vunpack.c.h.b16 %v169
    %v2164 = vunpack.c.l.b16 %v170
    %v2165 = vunpack.c.h.b16 %v170
    %v2166 = vunpack.c.l.b16 %v171
    %v2167 = vunpack.c.h.b16 %v171
    %v2168 = vunpack.c.l.b16 %v172
    %v2169 = vunpack.c.h.b16 %v172
    %v2170 = vunpack.c.l.b16 %v173
    %v2171 = vunpack.c.h.b16 %v173
    %v2172 = vunpack.c.l.b16 %v174
    %v2173 = vunpack.c.h.b16 %v174
    %v2174 = vunpack.c.l.b16 %v175
    %v2175 = vunpack.c.h.b16 %v175
    %v2176 = vunpack.c.l.b16 %v176
    %v2177 = vunpack.c.h.b16 %v176
    %v2178 = vunpack.c.l.b16 %v177
    %v2179 = vunpack.c.h.b16 %v177
    %v2180 = vunpack.c.l.b16 %v178
    %v2181 = vunpack.c.h.b16 %v178
    %v2182 = vunpack.c.l.b16 %v179
    %v2183 = vunpack.c.h.b16 %v179
    %v2184 = vunpack.c.l.b16 %v180
    %v2185 = vunpack.c.h.b16 %v180
    %v2186 = vunpack.c.l.b16 %v181
    %v2187 = vunpack.c.h.b16 %v181
    %v2188 = vunpack.c.l.b16 %v182
    %v2189 = vunpack.c.h.b16 %v182
    %v2190 = vunpack.c.l.b16 %v183
    %v2191 = vunpack.c.h.b16 %v183
    %v2192 = vunpack.c.l.b16 %v184
    %v2193 = vunpack.c.h.b16 %v184
    %v2194 = vunpack.c.l.b16 %v185
    %v2195 = vunpack.c.h.b16 %v185
    %v2196 = vunpack.c.l.b16 %v186
    %v2197 = vunpack.c.h.b16 %v186
    %v2198 = vunpack.c.l.b16 %v187
    %v2199 = vunpack.c.h.b16 %v187
    %v2200 = vunpack.c.l.b16 %v188
    %v2201 = vunpack.c.h.b16 %v188
    %v2202 = vunpack.c.l.b16 %v189
    %v2203 = vunpack.c.h.b16 %v189
    %v2204 = vunpack.c.l.b16 %v190
    %v2205 = vunpack.c.h.b16 %v190
    %v2206 = vunpack.c.l.b16 %v191
    %v2207 = vunpack.c.h.b16 %v191
    %v2208 = vunpack.c.l.b16 %v192
    %v2209 = vunpack.c.h.b16 %v192
    %v2210 = vunpack.c.l.b16 %v193
    %v2211 = vunpack.c.h.b16 %v193
    %v2212 = vunpack.c.l.b16 %v194
    %v2213 = vunpack.c.h.b16 %v194
    %v2214 = vunpack.c.l.b16 %v195
    %v2215 = vunpack.c.h.b16 %v195
    %v2216 = vunpack.c.l.b16 %v196
    %v2217 = vunpack.c.h.b16 %v196
    %v2218 = vunpack.c.l.b16 %v197
    %v2219 = vunpack.c.h.b16 %v197
    %v2220 = vunpack.c.l.b16 %v198
    %v2221 = vunpack.c.h.b16 %v198
    %v2222 = vunpack.c.l.b16 %v199
    %v2223 = vunpack.c.h.b16 %v199
    %v2224 = vunpack.c.l.b16 %v200
    %v2225 = vunpack.c.h.b16 %v200
    %v2226 = vunpack.c.l.b16 %v201
    %v2227 = vunpack.c.h.b16 %v201
    %v2228 = vunpack.c.l.b16 %v202
    %v2229 = vunpack.c.h.b16 %v202
    %v2230 = vunpack.c.l.b16 %v203
    %v2231 = vunpack.c.h.b16 %v203
    %v2232 = vunpack.c.l.b16 %v204
    %v2233 = vunpack.c.h.b16 %v204
    %v2234 = vunpack.c.l.b16 %v205
    %v2235 = vunpack.c.h.b16 %v205
    %v2236 = vunpack.c.l.b16 %v206
    %v2237 = vunpack.c.h.b16 %v206
    %v2238 = vunpack.c.l.b16 %v207
    %v2239 = vunpack.c.h.b16 %v207
    %v2240 = vunpack.c.l.b16 %v208
    %v2241 = vunpack.c.h.b16 %v208
    %v2242 = vunpack.c.l.b16 %v209
    %v2243 = vunpack.c.h.b16 %v209
    %v2244 = vunpack.c.l.b16 %v210
    %v2245 = vunpack.c.h.b16 %v210
    %v2246 = vunpack.c.l.b16 %v211
    %v2247 = vunpack.c.h.b16 %v211
    %v2248 = vunpack.c.l.b16 %v212
    %v2249 = vunpack.c.h.b16 %v212
    %v2250 = vunpack.c.l.b16 %v213
    %v2251 = vunpack.c.h.b16 %v213
    %v2252 = vunpack.c.l.b16 %v214
    %v2253 = vunpack.c.h.b16 %v214
    %v2254 = vunpack.c.l.b16 %v215
    %v2255 = vunpack.c.h.b16 %v215
    %v2256 = vunpack.c.l.b16 %v216
    %v2257 = vunpack.c.h.b16 %v216
    %v2258 = vunpack.c.l.b16 %v217
    %v2259 = vunpack.c.h.b16 %v217
    %v2260 = vunpack.c.l.b16 %v218
    %v2261 = vunpack.c.h.b16 %v218
    %v2262 = vunpack.c.l.b16 %v219
    %v2263 = vunpack.c.h.b16 %v219
    %v2264 = vunpack.c.l.b16 %v220
    %v2265 = vunpack.c.h.b16 %v220
    %v2266 = vunpack.c.l.b16 %v221
    %v2267 = vunpack.c.h.b16 %v221
    %v2268 = vunpack.c.l.b16 %v222
    %v2269 = vunpack.c.h.b16 %v222
    %v2270 = vunpack.c.l.b16 %v223
    %v2271 = vunpack.c.h.b16 %v223
    %v2272 = vunpack.c.l.b16 %v224
    %v2273 = vunpack.c.h.b16 %v224
    %v2274 = vunpack.c.l.b16 %v225
    %v2275 = vunpack.c.h.b16 %v225
    %v2276 = vunpack.c.l.b16 %v226
    %v2277 = vunpack.c.h.b16 %v226
    %v2278 = vunpack.c.l.b16 %v227
    %v2279 = vunpack.c.h.b16 %v227
    %v2280 = vunpack.c.l.b16 %v228
    %v2281 = vunpack.c.h.b16 %v228
    %v2282 = vunpack.c.l.b16 %v229
    %v2283 = vunpack.c.h.b16 %v229
    %v2284 = vunpack.c.l.b16 %v230
    %v2285 = vunpack.c.h.b16 %v230
    %v2286 = vunpack.c.l.b16 %v231
    %v2287 = vunpack.c.h.b16 %v231
    %v2288 = vunpack.c.l.b16 %v232
    %v2289 = vunpack.c.h.b16 %v232
    %v2290 = vunpack.c.l.b16 %v233
    %v2291 = vunpack.c.h.b16 %v233
    %v2292 = vunpack.c.l.b16 %v234
    %v2293 = vunpack.c.h.b16 %v234
    %v2294 = vunpack.c.l.b16 %v235
    %v2295 = vunpack.c.h.b16 %v235
    %v2296 = vunpack.c.l.b16 %v236
    %v2297 = vunpack.c.h.b16 %v236
    %v2298 = vunpack.c.l.b16 %v237
    %v2299 = vunpack.c.h.b16 %v237
    %v2300 = vunpack.c.l.b16 %v238
    %v2301 = vunpack.c.h.b16 %v238
    %v2302 = vunpack.c.l.b16 %v239
    %v2303 = vunpack.c.h.b16 %v239
    %v2304 = vunpack.c.l.b16 %v240
    %v2305 = vunpack.c.h.b16 %v240
    %v2306 = vunpack.c.l.b16 %v241
    %v2307 = vunpack.c.h.b16 %v241
    %v2308 = vunpack.c.l.b16 %v242
    %v2309 = vunpack.c.h.b16 %v242
    %v2310 = vunpack.c.l.b16 %v243
    %v2311 = vunpack.c.h.b16 %v243
    %v2312 = vunpack.c.l.b16 %v244
    %v2313 = vunpack.c.h.b16 %v244
    %v2314 = vunpack.c.l.b16 %v245
    %v2315 = vunpack.c.h.b16 %v245
    %v2316 = vunpack.c.l.b16 %v246
    %v2317 = vunpack.c.h.b16 %v246
    %v2318 = vunpack.c.l.b16 %v247
    %v2319 = vunpack.c.h.b16 %v247
    %v2320 = vunpack.c.l.b16 %v248
    %v2321 = vunpack.c.h.b16 %v248
    %v2322 = vunpack.c.l.b16 %v249
    %v2323 = vunpack.c.h.b16 %v249
    %v2324 = vunpack.c.l.b16 %v250
    %v2325 = vunpack.c.h.b16 %v250
    %v2326 = vunpack.c.l.b16 %v251
    %v2327 = vunpack.c.h.b16 %v251
    %v2328 = vunpack.c.l.b16 %v252
    %v2329 = vunpack.c.h.b16 %v252
    %v2330 = vunpack.c.l.b16 %v253
    %v2331 = vunpack.c.h.b16 %v253
    %v2332 = vunpack.c.l.b16 %v254
    %v2333 = vunpack.c.h.b16 %v254
    %v2334 = vunpack.c.l.b16 %v255
    %v2335 = vunpack.c.h.b16 %v255
    %v2336 = vunpack.c.l.b16 %v256
    %v2337 = vunpack.c.h.b16 %v256
    %v2338 = vunpack.c.l.b16 %v257
    %v2339 = vunpack.c.h.b16 %v257
    %v2340 = vunpack.c.l.b16 %v258
    %v2341 = vunpack.c.h.b16 %v258
    %v2342 = vunpack.c.l.b16 %v259
    %v2343 = vunpack.c.h.b16 %v259
    %v2344 = vunpack.c.l.b16 %v260
    %v2345 = vunpack.c.h.b16 %v260
    %v2346 = vunpack.c.l.b16 %v261
    %v2347 = vunpack.c.h.b16 %v261
    %v2348 = vunpack.c.l.b16 %v262
    %v2349 = vunpack.c.h.b16 %v262
    %v2350 = vunpack.c.l.b16 %v263
    %v2351 = vunpack.c.h.b16 %v263
    %v2352 = vunpack.c.l.b16 %v264
    %v2353 = vunpack.c.h.b16 %v264
    %v2354 = vunpack.c.l.b16 %v265
    %v2355 = vunpack.c.h.b16 %v265
    %v2356 = vunpack.c.l.b16 %v266
    %v2357 = vunpack.c.h.b16 %v266
    %v2358 = vunpack.c.l.b16 %v267
    %v2359 = vunpack.c.h.b16 %v267
    %v2360 = vunpack.c.l.b16 %v268
    %v2361 = vunpack.c.h.b16 %v268
    %v2362 = vunpack.c.l.b16 %v269
    %v2363 = vunpack.c.h.b16 %v269
    %v2364 = vunpack.c.l.b16 %v270
    %v2365 = vunpack.c.h.b16 %v270
    %v2366 = vunpack.c.l.b16 %v271
    %v2367 = vunpack.c.h.b16 %v271
    %v2368 = vunpack.c.l.b16 %v272
    %v2369 = vunpack.c.h.b16 %v272
    %v2370 = vunpack.c.l.b16 %v273
    %v2371 = vunpack.c.h.b16 %v273
    %v2372 = vunpack.c.l.b16 %v274
    %v2373 = vunpack.c.h.b16 %v274
    %v2374 = vunpack.c.l.b16 %v275
    %v2375 = vunpack.c.h.b16 %v275
    %v2376 = vunpack.c.l.b16 %v276
    %v2377 = vunpack.c.h.b16 %v276
    %v2378 = vunpack.c.l.b16 %v277
    %v2379 = vunpack.c.h.b16 %v277
    %v2380 = vunpack.c.l.b16 %v278
    %v2381 = vunpack.c.h.b16 %v278
    %v2382 = vunpack.c.l.b16 %v279
    %v2383 = vunpack.c.h.b16 %v279
    %v2384 = vunpack.c.l.b16 %v280
    %v2385 = vunpack.c.h.b16 %v280
    %v2386 = vunpack.c.l.b16 %v281
    %v2387 = vunpack.c.h.b16 %v281
    %v2388 = vunpack.c.l.b16 %v282
    %v2389 = vunpack.c.h.b16 %v282
    %v2390 = vunpack.c.l.b16 %v283
    %v2391 = vunpack.c.h.b16 %v283
    %v2392 = vunpack.c.l.b16 %v284
    %v2393 = vunpack.c.h.b16 %v284
    %v2394 = vunpack.c.l.b16 %v285
    %v2395 = vunpack.c.h.b16 %v285
    %v2396 = vunpack.c.l.b16 %v286
    %v2397 = vunpack.c.h.b16 %v286
    %v2398 = vunpack.c.l.b16 %v287
    %v2399 = vunpack.c.h.b16 %v287
    %v2400 = vunpack.c.l.b16 %v288
    %v2401 = vunpack.c.h.b16 %v288
    %v2402 = vunpack.c.l.b16 %v289
    %v2403 = vunpack.c.h.b16 %v289
    %v2404 = vunpack.c.l.b16 %v290
    %v2405 = vunpack.c.h.b16 %v290
    %v2406 = vunpack.c.l.b16 %v291
    %v2407 = vunpack.c.h.b16 %v291
    %v2408 = vunpack.c.l.b16 %v292
    %v2409 = vunpack.c.h.b16 %v292
    %v2410 = vunpack.c.l.b16 %v293
    %v2411 = vunpack.c.h.b16 %v293
    %v2412 = vunpack.c.l.b16 %v294
    %v2413 = vunpack.c.h.b16 %v294
    %v2414 = vunpack.c.l.b16 %v295
    %v2415 = vunpack.c.h.b16 %v295
    %v2416 = vunpack.c.l.b16 %v296
    %v2417 = vunpack.c.h.b16 %v296
    %v2418 = vunpack.c.l.b16 %v297
    %v2419 = vunpack.c.h.b16 %v297
    %v2420 = vunpack.c.l.b16 %v298
    %v2421 = vunpack.c.h.b16 %v298
    %v2422 = vunpack.c.l.b16 %v299
    %v2423 = vunpack.c.h.b16 %v299
    %v2424 = vunpack.c.l.b16 %v300
    %v2425 = vunpack.c.h.b16 %v300
    %v2426 = vunpack.c.l.b16 %v301
    %v2427 = vunpack.c.h.b16 %v301
    %v2428 = vunpack.c.l.b16 %v302
    %v2429 = vunpack.c.h.b16 %v302
    %v2430 = vunpack.c.l.b16 %v303
    %v2431 = vunpack.c.h.b16 %v303
    %v2432 = vunpack.c.l.b16 %v304
    %v2433 = vunpack.c.h.b16 %v304
    %v2434 = vunpack.c.l.b16 %v305
    %v2435 = vunpack.c.h.b16 %v305
    %v2436 = vunpack.c.l.b16 %v306
    %v2437 = vunpack.c.h.b16 %v306
    %v2438 = vunpack.c.l.b16 %v307
    %v2439 = vunpack.c.h.b16 %v307
    %v2440 = vunpack.c.l.b16 %v308
    %v2441 = vunpack.c.h.b16 %v308
    %v2442 = vunpack.c.l.b16 %v309
    %v2443 = vunpack.c.h.b16 %v309
    %v2444 = vunpack.c.l.b16 %v310
    %v2445 = vunpack.c.h.b16 %v310
    %v2446 = vunpack.c.l.b16 %v311
    %v2447 = vunpack.c.h.b16 %v311
    %v2448 = vunpack.c.l.b16 %v312
    %v2449 = vunpack.c.h.b16 %v312
    %v2450 = vunpack.c.l.b16 %v313
    %v2451 = vunpack.c.h.b16 %v313
    %v2452 = vunpack.c.l.b16 %v314
    %v2453 = vunpack.c.h.b16 %v314
    %v2454 = vunpack.c.l.b16 %v315
    %v2455 = vunpack.c.h.b16 %v315
    %v2456 = vunpack.c.l.b16 %v316
    %v2457 = vunpack.c.h.b16 %v316
    %v2458 = vunpack.c.l.b16 %v317
    %v2459 = vunpack.c.h.b16 %v317
    %v2460 = vunpack.c.l.b16 %v318
    %v2461 = vunpack.c.h.b16 %v318
    %v2462 = vunpack.c.l.b16 %v319
    %v2463 = vunpack.c.h.b16 %v319
    %v2464 = vunpack.c.l.b16 %v320
    %v2465 = vunpack.c.h.b16 %v320
    %v2466 = vunpack.c.l.b16 %v321
    %v2467 = vunpack.c.h.b16 %v321
    %v2468 = vunpack.c.l.b16 %v322
    %v2469 = vunpack.c.h.b16 %v322
    %v2470 = vunpack.c.l.b16 %v323
    %v2471 = vunpack.c.h.b16 %v323
    %v2472 = vunpack.c.l.b16 %v324
    %v2473 = vunpack.c.h.b16 %v324
    %v2474 = vunpack.c.l.b16 %v325
    %v2475 = vunpack.c.h.b16 %v325
    %v2476 = vunpack.c.l.b16 %v326
    %v2477 = vunpack.c.h.b16 %v326
    %v2478 = vunpack.c.l.b16 %v327
    %v2479 = vunpack.c.h.b16 %v327
    %v2480 = vunpack.c.l.b16 %v328
    %v2481 = vunpack.c.h.b16 %v328
    %v2482 = vunpack.c.l.b16 %v329
    %v2483 = vunpack.c.h.b16 %v329
    %v2484 = vunpack.c.l.b16 %v330
    %v2485 = vunpack.c.h.b16 %v330
    %v2486 = vunpack.c.l.b16 %v331
    %v2487 = vunpack.c.h.b16 %v331
    %v2488 = vunpack.c.l.b16 %v332
    %v2489 = vunpack.c.h.b16 %v332
    %v2490 = vunpack.c.l.b16 %v333
    %v2491 = vunpack.c.h.b16 %v333
    %v2492 = vunpack.c.l.b16 %v334
    %v2493 = vunpack.c.h.b16 %v334
    %v2494 = vunpack.c.l.b16 %v335
    %v2495 = vunpack.c.h.b16 %v335
    %v2496 = vunpack.c.l.b16 %v336
    %v2497 = vunpack.c.h.b16 %v336
    %v2498 = vunpack.c.l.b16 %v337
    %v2499 = vunpack.c.h.b16 %v337
    %v2500 = vunpack.c.l.b16 %v338
    %v2501 = vunpack.c.h.b16 %v338
    %v2502 = vunpack.c.l.b16 %v339
    %v2503 = vunpack.c.h.b16 %v339
    %v2504 = vunpack.c.l.b16 %v340
    %v2505 = vunpack.c.h.b16 %v340
    %v2506 = vunpack.c.l.b16 %v341
    %v2507 = vunpack.c.h.b16 %v341
    %v2508 = vunpack.c.l.b16 %v342
    %v2509 = vunpack.c.h.b16 %v342
    %v2510 = vunpack.c.l.b16 %v343
    %v2511 = vunpack.c.h.b16 %v343
    %v2512 = vpack.c.b16 %v2116, %v2112
    %v2513 = vpack.c.b16 %v2117, %v2113
    %v2514 = vpack.c.b16 %v2118, %v2114
    %v2515 = vpack.c.b16 %v2119, %v2115
    %v2516 = vpack.c.b16 %v2124, %v2120
    %v2517 = vpack.c.b16 %v2125, %v2121
    %v2518 = vpack.c.b16 %v2126, %v2122
    %v2519 = vpack.c.b16 %v2127, %v2123
    %v2520 = vpack.c.b16 %v2132, %v2128
    %v2521 = vpack.c.b16 %v2133, %v2129
    %v2522 = vpack.c.b16 %v2134, %v2130
    %v2523 = vpack.c.b16 %v2135, %v2131
    %v2524 = vpack.c.b16 %v2140, %v2136
    %v2525 = vpack.c.b16 %v2141, %v2137
    %v2526 = vpack.c.b16 %v2142, %v2138
    %v2527 = vpack.c.b16 %v2143, %v2139
    %v2528 = vpack.c.b16 %v2148, %v2144
    %v2529 = vpack.c.b16 %v2149, %v2145
    %v2530 = vpack.c.b16 %v2150, %v2146
    %v2531 = vpack.c.b16 %v2151, %v2147
    %v2532 = vpack.c.b16 %v2156, %v2152
    %v2533 = vpack.c.b16 %v2157, %v2153
    %v2534 = vpack.c.b16 %v2158, %v2154
    %v2535 = vpack.c.b16 %v2159, %v2155
    %v2536 = vpack.c.b16 %v2164, %v2160
    %v2537 = vpack.c.b16 %v2165, %v2161
    %v2538 = vpack.c.b16 %v2166, %v2162
    %v2539 = vpack.c.b16 %v2167, %v2163
    %v2540 = vpack.c.b16 %v2172, %v2168
    %v2541 = vpack.c.b16 %v2173, %v2169
    %v2542 = vpack.c.b16 %v2174, %v2170
    %v2543 = vpack.c.b16 %v2175, %v2171
    %v2544 = vpack.c.b16 %v2180, %v2176
    %v2545 = vpack.c.b16 %v2181, %v2177
    %v2546 = vpack.c.b16 %v2182, %v2178
    %v2547 = vpack.c.b16 %v2183, %v2179
    %v2548 = vpack.c.b16 %v2188, %v2184
    %v2549 = vpack.c.b16 %v2189, %v2185
    %v2550 = vpack.c.b16 %v2190, %v2186
    %v2551 = vpack.c.b16 %v2191, %v2187
    %v2552 = vpack.c.b16 %v2196, %v2192
    %v2553 = vpack.c.b16 %v2197, %v2193
    %v2554 = vpack.c.b16 %v2198, %v2194
    %v2555 = vpack.c.b16 %v2199, %v2195
    %v2556 = vpack.c.b16 %v2204, %v2200
    %v2557 = vpack.c.b16 %v2205, %v2201
    %v2558 = vpack.c.b16 %v2206, %v2202
    %v2559 = vpack.c.b16 %v2207, %v2203
    %v2560 = vpack.c.b16 %v2212, %v2208
    %v2561 = vpack.c.b16 %v2213, %v2209
    %v2562 = vpack.c.b16 %v2214, %v2210
    %v2563 = vpack.c.b16 %v2215, %v2211
    %v2564 = vpack.c.b16 %v2220, %v2216
    %v2565 = vpack.c.b16 %v2221, %v2217
    %v2566 = vpack.c.b16 %v2222, %v2218
    %v2567 = vpack.c.b16 %v2223, %v2219
    %v2568 = vpack.c.b16 %v2228, %v2224
    %v2569 = vpack.c.b16 %v2229, %v2225
    %v2570 = vpack.c.b16 %v2230, %v2226
    %v2571 = vpack.c.b16 %v2231, %v2227
    %v2572 = vpack.c.b16 %v2236, %v2232
    %v2573 = vpack.c.b16 %v2237, %v2233
    %v2574 = vpack.c.b16 %v2238, %v2234
    %v2575 = vpack.c.b16 %v2239, %v2235
    %v2576 = vpack.c.b16 %v2244, %v2240
    %v2577 = vpack.c.b16 %v2245, %v2241
    %v2578 = vpack.c.b16 %v2246, %v2242
    %v2579 = vpack.c.b16 %v2247, %v2243
    %v2580 = vpack.c.b16 %v2252, %v2248
    %v2581 = vpack.c.b16 %v2253, %v2249
    %v2582 = vpack.c.b16 %v2254, %v2250
    %v2583 = vpack.c.b16 %v2255, %v2251
    %v2584 = vpack.c.b16 %v2260, %v2256
    %v2585 = vpack.c.b16 %v2261, %v2257
    %v2586 = vpack.c.b16 %v2262, %v2258
    %v2587 = vpack.c.b16 %v2263, %v2259
    %v2588 = vpack.c.b16 %v2268, %v2264
    %v2589 = vpack.c.b16 %v2269, %v2265
    %v2590 = vpack.c.b16 %v2270, %v2266
    %v2591 = vpack.c.b16 %v2271, %v2267
    %v2592 = vpack.c.b16 %v2276, %v2272
    %v2593 = vpack.c.b16 %v2277, %v2273
    %v2594 = vpack.c.b16 %v2278, %v2274
    %v2595 = vpack.c.b16 %v2279, %v2275
    %v2596 = vpack.c.b16 %v2284, %v2280
    %v2597 = vpack.c.b16 %v2285, %v2281
    %v2598 = vpack.c.b16 %v2286, %v2282
    %v2599 = vpack.c.b16 %v2287, %v2283
    %v2600 = vpack.c.b16 %v2292, %v2288
    %v2601 = vpack.c.b16 %v2293, %v2289
    %v2602 = vpack.c.b16 %v2294, %v2290
    %v2603 = vpack.c.b16 %v2295, %v2291
    %v2604 = vpack.c.b16 %v2300, %v2296
    %v2605 = vpack.c.b16 %v2301, %v2297
    %v2606 = vpack.c.b16 %v2302, %v2298
    %v2607 = vpack.c.b16 %v2303, %v2299
    %v2608 = vpack.c.b16 %v2308, %v2304
    %v2609 = vpack.c.b16 %v2309, %v2305
    %v2610 = vpack.c.b16 %v2310, %v2306
    %v2611 = vpack.c.b16 %v2311, %v2307
    %v2612 = vpack.c.b16 %v2316, %v2312
    %v2613 = vpack.c.b16 %v2317, %v2313
    %v2614 = vpack.c.b16 %v2318, %v2314
    %v2615 = vpack.c.b16 %v2319, %v2315
    %v2616 = vpack.c.b16 %v2324, %v2320
    %v2617 = vpack.c.b16 %v2325, %v2321
    %v2618 = vpack.c.b16 %v2326, %v2322
    %v2619 = vpack.c.b16 %v2327, %v2323
    %v2620 = vpack.c.b16 %v2332, %v2328
    %v2621 = vpack.c.b16 %v2333, %v2329
    %v2622 = vpack.c.b16 %v2334, %v2330
    %v2623 = vpack.c.b16 %v2335, %v2331
    %v2624 = vpack.c.b16 %v2340, %v2336
    %v2625 = vpack.c.b16 %v2341, %v2337
    %v2626 = vpack.c.b16 %v2342, %v2338
    %v2627 = vpack.c.b16 %v2343, %v2339
    %v2628 = vpack.c.b16 %v2348, %v2344
    %v2629 = vpack.c.b16 %v2349, %v2345
    %v2630 = vpack.c.b16 %v2350, %v2346
    %v2631 = vpack.c.b16 %v2351, %v2347
    %v2632 = vpack.c.b16 %v2356, %v2352
    %v2633 = vpack.c.b16 %v2357, %v2353
    %v2634 = vpack.c.b16 %v2358, %v2354
    %v2635 = vpack.c.b16 %v2359, %v2355
    %v2636 = vpack.c.b16 %v2364, %v2360
    %v2637 = vpack.c.b16 %v2365, %v2361
    %v2638 = vpack.c.b16 %v2366, %v2362
    %v2639 = vpack.c.b16 %v2367, %v2363
    %v2640 = vpack.c.b16 %v2372, %v2368
    %v2641 = vpack.c.b16 %v2373, %v2369
    %v2642 = vpack.c.b16 %v2374, %v2370
    %v2643 = vpack.c.b16 %v2375, %v2371
    %v2644 = vpack.c.b16 %v2380, %v2376
    %v2645 = vpack.c.b16 %v2381, %v2377
    %v2646 = vpack.c.b16 %v2382, %v2378
    %v2647 = vpack.c.b16 %v2383, %v2379
    %v2648 = vpack.c.b16 %v2388, %v2384
    %v2649 = vpack.c.b16 %v2389, %v2385
    %v2650 = vpack.c.b16 %v2390, %v2386
    %v2651 = vpack.c.b16 %v2391, %v2387
    %v2652 = vpack.c.b16 %v2396, %v2392
    %v2653 = vpack.c.b16 %v2397, %v2393
    %v2654 = vpack.c.b16 %v2398, %v2394
    %v2655 = vpack.c.b16 %v2399, %v2395
    %v2656 = vpack.c.b16 %v2404, %v2400
    %v2657 = vpack.c.b16 %v2405, %v2401
    %v2658 = vpack.c.b16 %v2406, %v2402
    %v2659 = vpack.c.b16 %v2407, %v2403
    %v2660 = vpack.c.b16 %v2412, %v2408
    %v2661 = vpack.c.b16 %v2413, %v2409
    %v2662 = vpack.c.b16 %v2414, %v2410
    %v2663 = vpack.c.b16 %v2415, %v2411
    %v2664 = vpack.c.b16 %v2420, %v2416
    %v2665 = vpack.c.b16 %v2421, %v2417
    %v2666 = vpack.c.b16 %v2422, %v2418
    %v2667 = vpack.c.b16 %v2423, %v2419
    %v2668 = vpack.c.b16 %v2428, %v2424
    %v2669 = vpack.c.b16 %v2429, %v2425
    %v2670 = vpack.c.b16 %v2430, %v2426
    %v2671 = vpack.c.b16 %v2431, %v2427
    %v2672 = vpack.c.b16 %v2436, %v2432
    %v2673 = vpack.c.b16 %v2437, %v2433
    %v2674 = vpack.c.b16 %v2438, %v2434
    %v2675 = vpack.c.b16 %v2439, %v2435
    %v2676 = vpack.c.b16 %v2444, %v2440
    %v2677 = vpack.c.b16 %v2445, %v2441
    %v2678 = vpack.c.b16 %v2446, %v2442
    %v2679 = vpack.c.b16 %v2447, %v2443
    %v2680 = vpack.c.b16 %v2452, %v2448
    %v2681 = vpack.c.b16 %v2453, %v2449
    %v2682 = vpack.c.b16 %v2454, %v2450
    %v2683 = vpack.c.b16 %v2455, %v2451
    %v2684 = vpack.c.b16 %v2460, %v2456
    %v2685 = vpack.c.b16 %v2461, %v2457
    %v2686 = vpack.c.b16 %v2462, %v2458
    %v2687 = vpack.c.b16 %v2463, %v2459
    %v2688 = vpack.c.b16 %v2468, %v2464
    %v2689 = vpack.c.b16 %v2469, %v2465
    %v2690 = vpack.c.b16 %v2470, %v2466
    %v2691 = vpack.c.b16 %v2471, %v2467
    %v2692 = vpack.c.b16 %v2476, %v2472
    %v2693 = vpack.c.b16 %v2477, %v2473
    %v2694 = vpack.c.b16 %v2478, %v2474
    %v2695 = vpack.c.b16 %v2479, %v2475
    %v2696 = vpack.c.b16 %v2484, %v2480
    %v2697 = vpack.c.b16 %v2485, %v2481
    %v2698 = vpack.c.b16 %v2486, %v2482
    %v2699 = vpack.c.b16 %v2487, %v2483
    %v2700 = vpack.c.b16 %v2492, %v2488
    %v2701 = vpack.c.b16 %v2493, %v2489
    %v2702 = vpack.c.b16 %v2494, %v2490
    %v2703 = vpack.c.b16 %v2495, %v2491
    %v2704 = vpack.c.b16 %v2500, %v2496
    %v2705 = vpack.c.b16 %v2501, %v2497
    %v2706 = vpack.c.b16 %v2502, %v2498
    %v2707 = vpack.c.b16 %v2503, %v2499
    %v2708 = vpack.c.b16 %v2508, %v2504
    %v2709 = vpack.c.b16 %v2509, %v2505
    %v2710 = vpack.c.b16 %v2510, %v2506
    %v2711 = vpack.c.b16 %v2511, %v2507
    %v2913 = vsel %vm1544, %v129, 0
    %2915 = vmatpush.bf16.msra.mxu0 %v2540
    %2916 = vmatpush.bf16.msra.mxu0 %v2536
    %2917 = vmatpush.bf16.msra.mxu0 %v2532
    %2918 = vmatpush.bf16.msra.mxu0 %v2528
    %2919 = vmatpush.bf16.msra.mxu0 %v2524
    %2920 = vmatpush.bf16.msra.mxu0 %v2520
    %2921 = vmatpush.bf16.msra.mxu0 %v2516
    %2922 = vmatpush.bf16.msra.mxu0 %v2512
    %2923 = vmatmul.bf16.gmra.mxu0 %v123
    %v2924 = vpop.f32.mrf.mxu0
    %v2925 = vadd.f32 %v1636, %v2924
    %v2926 = vpop.f32.mrf.mxu0
    %2927 = vdwg.mxu0
    %2928 = vmatpush.bf16.msra.mxu0 %v2572
    %2929 = vmatpush.bf16.msra.mxu0 %v2568
    %2930 = vmatpush.bf16.msra.mxu0 %v2564
    %2931 = vmatpush.bf16.msra.mxu0 %v2560
    %2932 = vmatpush.bf16.msra.mxu0 %v2556
    %2933 = vmatpush.bf16.msra.mxu0 %v2552
    %2934 = vmatpush.bf16.msra.mxu0 %v2548
    %2935 = vmatpush.bf16.msra.mxu0 %v2544
    %2936 = vmatmul.bf16.gmra.mxu0 %v124
    %v2937 = vpop.f32.mrf.mxu0
    %v2938 = vadd.f32 %v2925, %v2937
    %v2939 = vpop.f32.mrf.mxu0
    %2940 = vdwg.mxu0
    %2941 = vmatpush.bf16.msra.mxu0 %v2604
    %2942 = vmatpush.bf16.msra.mxu0 %v2600
    %2943 = vmatpush.bf16.msra.mxu0 %v2596
    %2944 = vmatpush.bf16.msra.mxu0 %v2592
    %2945 = vmatpush.bf16.msra.mxu0 %v2588
    %2946 = vmatpush.bf16.msra.mxu0 %v2584
    %2947 = vmatpush.bf16.msra.mxu0 %v2580
    %2948 = vmatpush.bf16.msra.mxu0 %v2576
    %2949 = vmatmul.bf16.gmra.mxu0 %v125
    %v2950 = vpop.f32.mrf.mxu0
    %v2951 = vadd.f32 %v2938, %v2950
    %v2952 = vpop.f32.mrf.mxu0
    %2953 = vdwg.mxu0
    %2954 = vmatpush.bf16.msra.mxu0 %v2636
    %2955 = vmatpush.bf16.msra.mxu0 %v2632
    %2956 = vmatpush.bf16.msra.mxu0 %v2628
    %2957 = vmatpush.bf16.msra.mxu0 %v2624
    %2958 = vmatpush.bf16.msra.mxu0 %v2620
    %2959 = vmatpush.bf16.msra.mxu0 %v2616
    %2960 = vmatpush.bf16.msra.mxu0 %v2612
    %2961 = vmatpush.bf16.msra.mxu0 %v2608
    %2962 = vmatmul.bf16.gmra.mxu0 %v126
    %v2963 = vpop.f32.mrf.mxu0
    %v2964 = vadd.f32 %v2951, %v2963
    %v2965 = vpop.f32.mrf.mxu0
    %2966 = vdwg.mxu0
    %2967 = vmatpush.bf16.msra.mxu0 %v2668
    %2968 = vmatpush.bf16.msra.mxu0 %v2664
    %2969 = vmatpush.bf16.msra.mxu0 %v2660
    %2970 = vmatpush.bf16.msra.mxu0 %v2656
    %2971 = vmatpush.bf16.msra.mxu0 %v2652
    %2972 = vmatpush.bf16.msra.mxu0 %v2648
    %2973 = vmatpush.bf16.msra.mxu0 %v2644
    %2974 = vmatpush.bf16.msra.mxu0 %v2640
    %2975 = vmatmul.bf16.gmra.mxu0 %v127
    %v2976 = vpop.f32.mrf.mxu0
    %v2977 = vadd.f32 %v2964, %v2976
    %v2978 = vpop.f32.mrf.mxu0
    %2979 = vdwg.mxu0
    %2980 = vmatpush.bf16.msra.mxu0 %v2700
    %2981 = vmatpush.bf16.msra.mxu0 %v2696
    %2982 = vmatpush.bf16.msra.mxu0 %v2692
    %2983 = vmatpush.bf16.msra.mxu0 %v2688
    %2984 = vmatpush.bf16.msra.mxu0 %v2684
    %2985 = vmatpush.bf16.msra.mxu0 %v2680
    %2986 = vmatpush.bf16.msra.mxu0 %v2676
    %2987 = vmatpush.bf16.msra.mxu0 %v2672
    %2988 = vmatmul.bf16.gmra.mxu0 %v128
    %v2989 = vpop.f32.mrf.mxu0
    %v2990 = vadd.f32 %v2977, %v2989
    %v2991 = vpop.f32.mrf.mxu0
    %2992 = vdwg.mxu0
    %2993 = vmatpush.bf16.msra.mxu0 0
    %2994 = vmatpush.bf16.msra.mxu0 0
    %2995 = vmatpush.bf16.msra.mxu0 0
    %2996 = vmatpush.bf16.msra.mxu0 0
    %2997 = vmatpush.bf16.msra.mxu0 0
    %2998 = vmatpush.bf16.msra.mxu0 0
    %2999 = vmatpush.bf16.msra.mxu0 %v2708
    %3000 = vmatpush.bf16.msra.mxu0 %v2704
    %3001 = vmatmul.bf16.gmra.mxu0 %v2913
    %v3002 = vpop.f32.mrf.mxu0
    %v3003 = vadd.f32 %v2990, %v3002
    %v3004 = vpop.f32.mrf.mxu0
    %3005 = vdwg.mxu0
    %3006 = vmatpush.bf16.msra.mxu0 %v2541
    %3007 = vmatpush.bf16.msra.mxu0 %v2537
    %3008 = vmatpush.bf16.msra.mxu0 %v2533
    %3009 = vmatpush.bf16.msra.mxu0 %v2529
    %3010 = vmatpush.bf16.msra.mxu0 %v2525
    %3011 = vmatpush.bf16.msra.mxu0 %v2521
    %3012 = vmatpush.bf16.msra.mxu0 %v2517
    %3013 = vmatpush.bf16.msra.mxu0 %v2513
    %3014 = vmatmul.bf16.gmra.mxu0 %v123
    %v3015 = vpop.f32.mrf.mxu0
    %v3016 = vadd.f32 %v1727, %v3015
    %v3017 = vpop.f32.mrf.mxu0
    %3018 = vdwg.mxu0
    %3019 = vmatpush.bf16.msra.mxu0 %v2573
    %3020 = vmatpush.bf16.msra.mxu0 %v2569
    %3021 = vmatpush.bf16.msra.mxu0 %v2565
    %3022 = vmatpush.bf16.msra.mxu0 %v2561
    %3023 = vmatpush.bf16.msra.mxu0 %v2557
    %3024 = vmatpush.bf16.msra.mxu0 %v2553
    %3025 = vmatpush.bf16.msra.mxu0 %v2549
    %3026 = vmatpush.bf16.msra.mxu0 %v2545
    %3027 = vmatmul.bf16.gmra.mxu0 %v124
    %v3028 = vpop.f32.mrf.mxu0
    %v3029 = vadd.f32 %v3016, %v3028
    %v3030 = vpop.f32.mrf.mxu0
    %3031 = vdwg.mxu0
    %3032 = vmatpush.bf16.msra.mxu0 %v2605
    %3033 = vmatpush.bf16.msra.mxu0 %v2601
    %3034 = vmatpush.bf16.msra.mxu0 %v2597
    %3035 = vmatpush.bf16.msra.mxu0 %v2593
    %3036 = vmatpush.bf16.msra.mxu0 %v2589
    %3037 = vmatpush.bf16.msra.mxu0 %v2585
    %3038 = vmatpush.bf16.msra.mxu0 %v2581
    %3039 = vmatpush.bf16.msra.mxu0 %v2577
    %3040 = vmatmul.bf16.gmra.mxu0 %v125
    %v3041 = vpop.f32.mrf.mxu0
    %v3042 = vadd.f32 %v3029, %v3041
    %v3043 = vpop.f32.mrf.mxu0
    %3044 = vdwg.mxu0
    %3045 = vmatpush.bf16.msra.mxu0 %v2637
    %3046 = vmatpush.bf16.msra.mxu0 %v2633
    %3047 = vmatpush.bf16.msra.mxu0 %v2629
    %3048 = vmatpush.bf16.msra.mxu0 %v2625
    %3049 = vmatpush.bf16.msra.mxu0 %v2621
    %3050 = vmatpush.bf16.msra.mxu0 %v2617
    %3051 = vmatpush.bf16.msra.mxu0 %v2613
    %3052 = vmatpush.bf16.msra.mxu0 %v2609
    %3053 = vmatmul.bf16.gmra.mxu0 %v126
    %v3054 = vpop.f32.mrf.mxu0
    %v3055 = vadd.f32 %v3042, %v3054
    %v3056 = vpop.f32.mrf.mxu0
    %3057 = vdwg.mxu0
    %3058 = vmatpush.bf16.msra.mxu0 %v2669
    %3059 = vmatpush.bf16.msra.mxu0 %v2665
    %3060 = vmatpush.bf16.msra.mxu0 %v2661
    %3061 = vmatpush.bf16.msra.mxu0 %v2657
    %3062 = vmatpush.bf16.msra.mxu0 %v2653
    %3063 = vmatpush.bf16.msra.mxu0 %v2649
    %3064 = vmatpush.bf16.msra.mxu0 %v2645
    %3065 = vmatpush.bf16.msra.mxu0 %v2641
    %3066 = vmatmul.bf16.gmra.mxu0 %v127
    %v3067 = vpop.f32.mrf.mxu0
    %v3068 = vadd.f32 %v3055, %v3067
    %v3069 = vpop.f32.mrf.mxu0
    %3070 = vdwg.mxu0
    %3071 = vmatpush.bf16.msra.mxu0 %v2701
    %3072 = vmatpush.bf16.msra.mxu0 %v2697
    %3073 = vmatpush.bf16.msra.mxu0 %v2693
    %3074 = vmatpush.bf16.msra.mxu0 %v2689
    %3075 = vmatpush.bf16.msra.mxu0 %v2685
    %3076 = vmatpush.bf16.msra.mxu0 %v2681
    %3077 = vmatpush.bf16.msra.mxu0 %v2677
    %3078 = vmatpush.bf16.msra.mxu0 %v2673
    %3079 = vmatmul.bf16.gmra.mxu0 %v128
    %v3080 = vpop.f32.mrf.mxu0
    %v3081 = vadd.f32 %v3068, %v3080
    %v3082 = vpop.f32.mrf.mxu0
    %3083 = vdwg.mxu0
    %3084 = vmatpush.bf16.msra.mxu0 0
    %3085 = vmatpush.bf16.msra.mxu0 0
    %3086 = vmatpush.bf16.msra.mxu0 0
    %3087 = vmatpush.bf16.msra.mxu0 0
    %3088 = vmatpush.bf16.msra.mxu0 0
    %3089 = vmatpush.bf16.msra.mxu0 0
    %3090 = vmatpush.bf16.msra.mxu0 %v2709
    %3091 = vmatpush.bf16.msra.mxu0 %v2705
    %3092 = vmatmul.bf16.gmra.mxu0 %v2913
    %v3093 = vpop.f32.mrf.mxu0
    %v3094 = vadd.f32 %v3081, %v3093
    %v3095 = vpop.f32.mrf.mxu0
    %3096 = vdwg.mxu0
    %3097 = vmatpush.bf16.msra.mxu0 %v2542
    %3098 = vmatpush.bf16.msra.mxu0 %v2538
    %3099 = vmatpush.bf16.msra.mxu0 %v2534
    %3100 = vmatpush.bf16.msra.mxu0 %v2530
    %3101 = vmatpush.bf16.msra.mxu0 %v2526
    %3102 = vmatpush.bf16.msra.mxu0 %v2522
    %3103 = vmatpush.bf16.msra.mxu0 %v2518
    %3104 = vmatpush.bf16.msra.mxu0 %v2514
    %3105 = vmatmul.bf16.gmra.mxu0 %v123
    %v3106 = vpop.f32.mrf.mxu0
    %v3107 = vadd.f32 %v1818, %v3106
    %v3108 = vpop.f32.mrf.mxu0
    %3109 = vdwg.mxu0
    %3110 = vmatpush.bf16.msra.mxu0 %v2574
    %3111 = vmatpush.bf16.msra.mxu0 %v2570
    %3112 = vmatpush.bf16.msra.mxu0 %v2566
    %3113 = vmatpush.bf16.msra.mxu0 %v2562
    %3114 = vmatpush.bf16.msra.mxu0 %v2558
    %3115 = vmatpush.bf16.msra.mxu0 %v2554
    %3116 = vmatpush.bf16.msra.mxu0 %v2550
    %3117 = vmatpush.bf16.msra.mxu0 %v2546
    %3118 = vmatmul.bf16.gmra.mxu0 %v124
    %v3119 = vpop.f32.mrf.mxu0
    %v3120 = vadd.f32 %v3107, %v3119
    %v3121 = vpop.f32.mrf.mxu0
    %3122 = vdwg.mxu0
    %3123 = vmatpush.bf16.msra.mxu0 %v2606
    %3124 = vmatpush.bf16.msra.mxu0 %v2602
    %3125 = vmatpush.bf16.msra.mxu0 %v2598
    %3126 = vmatpush.bf16.msra.mxu0 %v2594
    %3127 = vmatpush.bf16.msra.mxu0 %v2590
    %3128 = vmatpush.bf16.msra.mxu0 %v2586
    %3129 = vmatpush.bf16.msra.mxu0 %v2582
    %3130 = vmatpush.bf16.msra.mxu0 %v2578
    %3131 = vmatmul.bf16.gmra.mxu0 %v125
    %v3132 = vpop.f32.mrf.mxu0
    %v3133 = vadd.f32 %v3120, %v3132
    %v3134 = vpop.f32.mrf.mxu0
    %3135 = vdwg.mxu0
    %3136 = vmatpush.bf16.msra.mxu0 %v2638
    %3137 = vmatpush.bf16.msra.mxu0 %v2634
    %3138 = vmatpush.bf16.msra.mxu0 %v2630
    %3139 = vmatpush.bf16.msra.mxu0 %v2626
    %3140 = vmatpush.bf16.msra.mxu0 %v2622
    %3141 = vmatpush.bf16.msra.mxu0 %v2618
    %3142 = vmatpush.bf16.msra.mxu0 %v2614
    %3143 = vmatpush.bf16.msra.mxu0 %v2610
    %3144 = vmatmul.bf16.gmra.mxu0 %v126
    %v3145 = vpop.f32.mrf.mxu0
    %v3146 = vadd.f32 %v3133, %v3145
    %v3147 = vpop.f32.mrf.mxu0
    %3148 = vdwg.mxu0
    %3149 = vmatpush.bf16.msra.mxu0 %v2670
    %3150 = vmatpush.bf16.msra.mxu0 %v2666
    %3151 = vmatpush.bf16.msra.mxu0 %v2662
    %3152 = vmatpush.bf16.msra.mxu0 %v2658
    %3153 = vmatpush.bf16.msra.mxu0 %v2654
    %3154 = vmatpush.bf16.msra.mxu0 %v2650
    %3155 = vmatpush.bf16.msra.mxu0 %v2646
    %3156 = vmatpush.bf16.msra.mxu0 %v2642
    %3157 = vmatmul.bf16.gmra.mxu0 %v127
    %v3158 = vpop.f32.mrf.mxu0
    %v3159 = vadd.f32 %v3146, %v3158
    %v3160 = vpop.f32.mrf.mxu0
    %3161 = vdwg.mxu0
    %3162 = vmatpush.bf16.msra.mxu0 %v2702
    %3163 = vmatpush.bf16.msra.mxu0 %v2698
    %3164 = vmatpush.bf16.msra.mxu0 %v2694
    %3165 = vmatpush.bf16.msra.mxu0 %v2690
    %3166 = vmatpush.bf16.msra.mxu0 %v2686
    %3167 = vmatpush.bf16.msra.mxu0 %v2682
    %3168 = vmatpush.bf16.msra.mxu0 %v2678
    %3169 = vmatpush.bf16.msra.mxu0 %v2674
    %3170 = vmatmul.bf16.gmra.mxu0 %v128
    %v3171 = vpop.f32.mrf.mxu0
    %v3172 = vadd.f32 %v3159, %v3171
    %v3173 = vpop.f32.mrf.mxu0
    %3174 = vdwg.mxu0
    %3175 = vmatpush.bf16.msra.mxu0 0
    %3176 = vmatpush.bf16.msra.mxu0 0
    %3177 = vmatpush.bf16.msra.mxu0 0
    %3178 = vmatpush.bf16.msra.mxu0 0
    %3179 = vmatpush.bf16.msra.mxu0 0
    %3180 = vmatpush.bf16.msra.mxu0 0
    %3181 = vmatpush.bf16.msra.mxu0 %v2710
    %3182 = vmatpush.bf16.msra.mxu0 %v2706
    %3183 = vmatmul.bf16.gmra.mxu0 %v2913
    %v3184 = vpop.f32.mrf.mxu0
    %v3185 = vadd.f32 %v3172, %v3184
    %v3186 = vpop.f32.mrf.mxu0
    %3187 = vdwg.mxu0
    %3188 = vmatpush.bf16.msra.mxu0 %v2543
    %3189 = vmatpush.bf16.msra.mxu0 %v2539
    %3190 = vmatpush.bf16.msra.mxu0 %v2535
    %3191 = vmatpush.bf16.msra.mxu0 %v2531
    %3192 = vmatpush.bf16.msra.mxu0 %v2527
    %3193 = vmatpush.bf16.msra.mxu0 %v2523
    %3194 = vmatpush.bf16.msra.mxu0 %v2519
    %3195 = vmatpush.bf16.msra.mxu0 %v2515
    %3196 = vmatmul.bf16.gmra.mxu0 %v123
    %v3197 = vpop.f32.mrf.mxu0
    %v3198 = vadd.f32 %v1909, %v3197
    %v3199 = vpop.f32.mrf.mxu0
    %3200 = vdwg.mxu0
    %3201 = vmatpush.bf16.msra.mxu0 %v2575
    %3202 = vmatpush.bf16.msra.mxu0 %v2571
    %3203 = vmatpush.bf16.msra.mxu0 %v2567
    %3204 = vmatpush.bf16.msra.mxu0 %v2563
    %3205 = vmatpush.bf16.msra.mxu0 %v2559
    %3206 = vmatpush.bf16.msra.mxu0 %v2555
    %3207 = vmatpush.bf16.msra.mxu0 %v2551
    %3208 = vmatpush.bf16.msra.mxu0 %v2547
    %3209 = vmatmul.bf16.gmra.mxu0 %v124
    %v3210 = vpop.f32.mrf.mxu0
    %v3211 = vadd.f32 %v3198, %v3210
    %v3212 = vpop.f32.mrf.mxu0
    %3213 = vdwg.mxu0
    %3214 = vmatpush.bf16.msra.mxu0 %v2607
    %3215 = vmatpush.bf16.msra.mxu0 %v2603
    %3216 = vmatpush.bf16.msra.mxu0 %v2599
    %3217 = vmatpush.bf16.msra.mxu0 %v2595
    %3218 = vmatpush.bf16.msra.mxu0 %v2591
    %3219 = vmatpush.bf16.msra.mxu0 %v2587
    %3220 = vmatpush.bf16.msra.mxu0 %v2583
    %3221 = vmatpush.bf16.msra.mxu0 %v2579
    %3222 = vmatmul.bf16.gmra.mxu0 %v125
    %v3223 = vpop.f32.mrf.mxu0
    %v3224 = vadd.f32 %v3211, %v3223
    %v3225 = vpop.f32.mrf.mxu0
    %3226 = vdwg.mxu0
    %3227 = vmatpush.bf16.msra.mxu0 %v2639
    %3228 = vmatpush.bf16.msra.mxu0 %v2635
    %3229 = vmatpush.bf16.msra.mxu0 %v2631
    %3230 = vmatpush.bf16.msra.mxu0 %v2627
    %3231 = vmatpush.bf16.msra.mxu0 %v2623
    %3232 = vmatpush.bf16.msra.mxu0 %v2619
    %3233 = vmatpush.bf16.msra.mxu0 %v2615
    %3234 = vmatpush.bf16.msra.mxu0 %v2611
    %3235 = vmatmul.bf16.gmra.mxu0 %v126
    %v3236 = vpop.f32.mrf.mxu0
    %v3237 = vadd.f32 %v3224, %v3236
    %v3238 = vpop.f32.mrf.mxu0
    %3239 = vdwg.mxu0
    %3240 = vmatpush.bf16.msra.mxu0 %v2671
    %3241 = vmatpush.bf16.msra.mxu0 %v2667
    %3242 = vmatpush.bf16.msra.mxu0 %v2663
    %3243 = vmatpush.bf16.msra.mxu0 %v2659
    %3244 = vmatpush.bf16.msra.mxu0 %v2655
    %3245 = vmatpush.bf16.msra.mxu0 %v2651
    %3246 = vmatpush.bf16.msra.mxu0 %v2647
    %3247 = vmatpush.bf16.msra.mxu0 %v2643
    %3248 = vmatmul.bf16.gmra.mxu0 %v127
    %v3249 = vpop.f32.mrf.mxu0
    %v3250 = vadd.f32 %v3237, %v3249
    %v3251 = vpop.f32.mrf.mxu0
    %3252 = vdwg.mxu0
    %3253 = vmatpush.bf16.msra.mxu0 %v2703
    %3254 = vmatpush.bf16.msra.mxu0 %v2699
    %3255 = vmatpush.bf16.msra.mxu0 %v2695
    %3256 = vmatpush.bf16.msra.mxu0 %v2691
    %3257 = vmatpush.bf16.msra.mxu0 %v2687
    %3258 = vmatpush.bf16.msra.mxu0 %v2683
    %3259 = vmatpush.bf16.msra.mxu0 %v2679
    %3260 = vmatpush.bf16.msra.mxu0 %v2675
    %3261 = vmatmul.bf16.gmra.mxu0 %v128
    %v3262 = vpop.f32.mrf.mxu0
    %v3263 = vadd.f32 %v3250, %v3262
    %v3264 = vpop.f32.mrf.mxu0
    %3265 = vdwg.mxu0
    %3266 = vmatpush.bf16.msra.mxu0 0
    %3267 = vmatpush.bf16.msra.mxu0 0
    %3268 = vmatpush.bf16.msra.mxu0 0
    %3269 = vmatpush.bf16.msra.mxu0 0
    %3270 = vmatpush.bf16.msra.mxu0 0
    %3271 = vmatpush.bf16.msra.mxu0 0
    %3272 = vmatpush.bf16.msra.mxu0 %v2711
    %3273 = vmatpush.bf16.msra.mxu0 %v2707
    %3274 = vmatmul.bf16.gmra.mxu0 %v2913
    %v3275 = vpop.f32.mrf.mxu0
    %v3276 = vadd.f32 %v3263, %v3275
    %v3277 = vpop.f32.mrf.mxu0
    %3278 = vdwg.mxu0
    %v3279 = vld [vmem:[#allocation10] sm:$0xf]
    %v3281 = vperm.slane %v3279, 0
    %v3282 = vperm.slane %v3279, 1
    %v3283 = vperm.slane %v3279, 2
    %v3284 = vperm.slane %v3279, 3
    %v3289 = vadd.f32 %v3003, %v3281
    %v3290 = vadd.f32 %v3094, %v3282
    %v3291 = vadd.f32 %v3185, %v3283
    %v3292 = vadd.f32 %v3276, %v3284
    %vm3293 = vcmp.gt.f32.partialorder %v3289, 0.0
    %vm3294 = vcmp.gt.f32.partialorder %v3290, 0.0
    %vm3295 = vcmp.gt.f32.partialorder %v3291, 0.0
    %vm3296 = vcmp.gt.f32.partialorder %v3292, 0.0
    %v3297 = vmul.f32 %v3289, 0.01
    %v3298 = vmul.f32 %v3290, 0.01
    %v3299 = vmul.f32 %v3291, 0.01
    %v3300 = vmul.f32 %v3292, 0.01
    %v3301 = vsel %vm3293, %v3289, %v3297
    %v3302 = vsel %vm3294, %v3290, %v3298
    %v3303 = vsel %vm3295, %v3291, %v3299
    %v3304 = vsel %vm3296, %v3292, %v3300
    %v3305 = vpack.c.bf16 %v3301, %v3301
    %v3306 = vpack.c.bf16 %v3302, %v3302
    %v3307 = vpack.c.bf16 %v3303, %v3303
    %v3308 = vpack.c.bf16 %v3304, %v3304
    %v3309 = vld [vmem:[#allocation11] sm:$0xf]
    %v3310 = vld [vmem:[#allocation11 + $0x4] sm:$0xf]
    %v3311 = vld [vmem:[#allocation11 + $0x8] sm:$0xf]
    %v3312 = vld [vmem:[#allocation11 + $0xc] sm:$0xf]
    %v3313 = vld [vmem:[#allocation11 + $0x10] sm:$0xf]
    %v3314 = vld [vmem:[#allocation11 + $0x14] sm:$0xf]
    %v3315 = vld [vmem:[#allocation11 + $0x18] sm:$0xf]
    %v3316 = vld [vmem:[#allocation11 + $0x1c] sm:$0xf]
    %v3317 = vld [vmem:[#allocation11 + $0x20] sm:$0xf]
    %v3318 = vld [vmem:[#allocation11 + $0x24] sm:$0xf]
    %v3319 = vld [vmem:[#allocation11 + $0x28] sm:$0xf]
    %v3320 = vld [vmem:[#allocation11 + $0x2c] sm:$0xf]
    %v3321 = vld [vmem:[#allocation11 + $0x30] sm:$0xf]
    %v3322 = vld [vmem:[#allocation11 + $0x34] sm:$0xf]
    %v3323 = vld [vmem:[#allocation11 + $0x38] sm:$0xf]
    %v3324 = vld [vmem:[#allocation11 + $0x3c] sm:$0xf]
    %v3325 = vld [vmem:[#allocation11 + $0x40] sm:$0xf]
    %v3326 = vld [vmem:[#allocation11 + $0x44] sm:$0xf]
    %v3327 = vld [vmem:[#allocation11 + $0x48] sm:$0xf]
    %v3328 = vld [vmem:[#allocation11 + $0x4c] sm:$0xf]
    %v3329 = vld [vmem:[#allocation11 + $0x50] sm:$0xf]
    %v3330 = vld [vmem:[#allocation11 + $0x54] sm:$0xf]
    %v3331 = vld [vmem:[#allocation11 + $0x58] sm:$0xf]
    %v3332 = vld [vmem:[#allocation11 + $0x5c] sm:$0xf]
    %v3333 = vld [vmem:[#allocation11 + $0x60] sm:$0xf]
    %v3334 = vld [vmem:[#allocation11 + $0x64] sm:$0xf]
    %v3335 = vld [vmem:[#allocation11 + $0x68] sm:$0xf]
    %v3336 = vld [vmem:[#allocation11 + $0x6c] sm:$0xf]
    %v3337 = vld [vmem:[#allocation11 + $0x70] sm:$0xf]
    %v3338 = vld [vmem:[#allocation11 + $0x74] sm:$0xf]
    %v3339 = vld [vmem:[#allocation11 + $0x78] sm:$0xf]
    %v3340 = vld [vmem:[#allocation11 + $0x7c] sm:$0xf]
    %v3341 = vld [vmem:[#allocation11 + $0x80] sm:$0xf]
    %v3342 = vld [vmem:[#allocation11 + $0x84] sm:$0xf]
    %v3343 = vld [vmem:[#allocation11 + $0x88] sm:$0xf]
    %v3344 = vld [vmem:[#allocation11 + $0x8c] sm:$0xf]
    %v3345 = vld [vmem:[#allocation11 + $0x90] sm:$0xf]
    %v3346 = vld [vmem:[#allocation11 + $0x94] sm:$0xf]
    %v3347 = vld [vmem:[#allocation11 + $0x98] sm:$0xf]
    %v3348 = vld [vmem:[#allocation11 + $0x9c] sm:$0xf]
    %v3349 = vld [vmem:[#allocation11 + $0xa0] sm:$0xf]
    %v3350 = vld [vmem:[#allocation11 + $0xa4] sm:$0xf]
    %v3351 = vld [vmem:[#allocation11 + $0xa8] sm:$0xf]
    %v3352 = vld [vmem:[#allocation11 + $0xac] sm:$0xf]
    %v3353 = vld [vmem:[#allocation11 + $0xb0] sm:$0xf]
    %v3354 = vld [vmem:[#allocation11 + $0xb4] sm:$0xf]
    %v3355 = vld [vmem:[#allocation11 + $0xb8] sm:$0xf]
    %v3356 = vld [vmem:[#allocation11 + $0xbc] sm:$0xf]
    %v3357 = vld [vmem:[#allocation11 + $0xc0] sm:$0xf]
    %v3358 = vld [vmem:[#allocation11 + $0xc4] sm:$0xf]
    %v3359 = vld [vmem:[#allocation11 + $0xc8] sm:$0xf]
    %v3360 = vld [vmem:[#allocation11 + $0xcc] sm:$0xf]
    %v3361 = vld [vmem:[#allocation11 + $0xd0] sm:$0xf]
    %v3362 = vld [vmem:[#allocation11 + $0xd4] sm:$0xf]
    %v3363 = vld [vmem:[#allocation11 + $0xd8] sm:$0xf]
    %v3364 = vld [vmem:[#allocation11 + $0xdc] sm:$0xf]
    %v3365 = vld [vmem:[#allocation11 + $0xe0] sm:$0xf]
    %v3366 = vld [vmem:[#allocation11 + $0xe4] sm:$0xf]
    %v3367 = vld [vmem:[#allocation11 + $0xe8] sm:$0xf]
    %v3368 = vld [vmem:[#allocation11 + $0xec] sm:$0xf]
    %v3369 = vld [vmem:[#allocation11 + $0xf0] sm:$0xf]
    %v3370 = vld [vmem:[#allocation11 + $0xf4] sm:$0xf]
    %v3371 = vld [vmem:[#allocation11 + $0xf8] sm:$0xf]
    %v3372 = vld [vmem:[#allocation11 + $0xfc] sm:$0xf]
    %v3373 = vld [vmem:[%s6] sm:$0x1]
    %v3375 = vperm.slane %v3373, 0
    %v3441 = vunpack.c.l.b16 %v3309
    %v3442 = vunpack.c.l.b16 %v3310
    %v3443 = vunpack.c.l.b16 %v3311
    %v3444 = vunpack.c.l.b16 %v3312
    %v3445 = vunpack.c.l.b16 %v3313
    %v3446 = vunpack.c.l.b16 %v3314
    %v3447 = vunpack.c.l.b16 %v3315
    %v3448 = vunpack.c.l.b16 %v3316
    %v3449 = vunpack.c.l.b16 %v3317
    %v3450 = vunpack.c.l.b16 %v3318
    %v3451 = vunpack.c.l.b16 %v3319
    %v3452 = vunpack.c.l.b16 %v3320
    %v3453 = vunpack.c.l.b16 %v3321
    %v3454 = vunpack.c.l.b16 %v3322
    %v3455 = vunpack.c.l.b16 %v3323
    %v3456 = vunpack.c.l.b16 %v3324
    %v3457 = vunpack.c.l.b16 %v3325
    %v3458 = vunpack.c.l.b16 %v3326
    %v3459 = vunpack.c.l.b16 %v3327
    %v3460 = vunpack.c.l.b16 %v3328
    %v3461 = vunpack.c.l.b16 %v3329
    %v3462 = vunpack.c.l.b16 %v3330
    %v3463 = vunpack.c.l.b16 %v3331
    %v3464 = vunpack.c.l.b16 %v3332
    %v3465 = vunpack.c.l.b16 %v3333
    %v3466 = vunpack.c.l.b16 %v3334
    %v3467 = vunpack.c.l.b16 %v3335
    %v3468 = vunpack.c.l.b16 %v3336
    %v3469 = vunpack.c.l.b16 %v3337
    %v3470 = vunpack.c.l.b16 %v3338
    %v3471 = vunpack.c.l.b16 %v3339
    %v3472 = vunpack.c.l.b16 %v3340
    %v3473 = vunpack.c.l.b16 %v3341
    %v3474 = vunpack.c.l.b16 %v3342
    %v3475 = vunpack.c.l.b16 %v3343
    %v3476 = vunpack.c.l.b16 %v3344
    %v3477 = vunpack.c.l.b16 %v3345
    %v3478 = vunpack.c.l.b16 %v3346
    %v3479 = vunpack.c.l.b16 %v3347
    %v3480 = vunpack.c.l.b16 %v3348
    %v3481 = vunpack.c.l.b16 %v3349
    %v3482 = vunpack.c.l.b16 %v3350
    %v3483 = vunpack.c.l.b16 %v3351
    %v3484 = vunpack.c.l.b16 %v3352
    %v3485 = vunpack.c.l.b16 %v3353
    %v3486 = vunpack.c.l.b16 %v3354
    %v3487 = vunpack.c.l.b16 %v3355
    %v3488 = vunpack.c.l.b16 %v3356
    %v3489 = vunpack.c.l.b16 %v3357
    %v3490 = vunpack.c.l.b16 %v3358
    %v3491 = vunpack.c.l.b16 %v3359
    %v3492 = vunpack.c.l.b16 %v3360
    %v3493 = vunpack.c.l.b16 %v3361
    %v3494 = vunpack.c.l.b16 %v3362
    %v3495 = vunpack.c.l.b16 %v3363
    %v3496 = vunpack.c.l.b16 %v3364
    %v3497 = vunpack.c.l.b16 %v3365
    %v3498 = vunpack.c.l.b16 %v3366
    %v3499 = vunpack.c.l.b16 %v3367
    %v3500 = vunpack.c.l.b16 %v3368
    %v3501 = vunpack.c.l.b16 %v3369
    %v3502 = vunpack.c.l.b16 %v3370
    %v3503 = vunpack.c.l.b16 %v3371
    %v3504 = vunpack.c.l.b16 %v3372
    %v3505 = vpack.c.b16 %v3442, %v3441
    %v3506 = vpack.c.b16 %v3444, %v3443
    %v3507 = vpack.c.b16 %v3446, %v3445
    %v3508 = vpack.c.b16 %v3448, %v3447
    %v3509 = vpack.c.b16 %v3450, %v3449
    %v3510 = vpack.c.b16 %v3452, %v3451
    %v3511 = vpack.c.b16 %v3454, %v3453
    %v3512 = vpack.c.b16 %v3456, %v3455
    %v3513 = vpack.c.b16 %v3458, %v3457
    %v3514 = vpack.c.b16 %v3460, %v3459
    %v3515 = vpack.c.b16 %v3462, %v3461
    %v3516 = vpack.c.b16 %v3464, %v3463
    %v3517 = vpack.c.b16 %v3466, %v3465
    %v3518 = vpack.c.b16 %v3468, %v3467
    %v3519 = vpack.c.b16 %v3470, %v3469
    %v3520 = vpack.c.b16 %v3472, %v3471
    %v3521 = vpack.c.b16 %v3474, %v3473
    %v3522 = vpack.c.b16 %v3476, %v3475
    %v3523 = vpack.c.b16 %v3478, %v3477
    %v3524 = vpack.c.b16 %v3480, %v3479
    %v3525 = vpack.c.b16 %v3482, %v3481
    %v3526 = vpack.c.b16 %v3484, %v3483
    %v3527 = vpack.c.b16 %v3486, %v3485
    %v3528 = vpack.c.b16 %v3488, %v3487
    %v3529 = vpack.c.b16 %v3490, %v3489
    %v3530 = vpack.c.b16 %v3492, %v3491
    %v3531 = vpack.c.b16 %v3494, %v3493
    %v3532 = vpack.c.b16 %v3496, %v3495
    %v3533 = vpack.c.b16 %v3498, %v3497
    %v3534 = vpack.c.b16 %v3500, %v3499
    %v3535 = vpack.c.b16 %v3502, %v3501
    %v3536 = vpack.c.b16 %v3504, %v3503
    %3569 = vmatpush.bf16.msra.mxu0 %v3512
    %3570 = vmatpush.bf16.msra.mxu0 %v3511
    %3571 = vmatpush.bf16.msra.mxu0 %v3510
    %3572 = vmatpush.bf16.msra.mxu0 %v3509
    %3573 = vmatpush.bf16.msra.mxu0 %v3508
    %3574 = vmatpush.bf16.msra.mxu0 %v3507
    %3575 = vmatpush.bf16.msra.mxu0 %v3506
    %3576 = vmatpush.bf16.msra.mxu0 %v3505
    %3577 = vmatmul.bf16.gmra.mxu0 %v3305
    %v3578 = vpop.f32.mrf.mxu0
    %v3579 = vadd.f32 %v3375, %v3578
    %v3580 = vpop.f32.mrf.mxu0
    %3581 = vdwg.mxu0
    %3582 = vmatpush.bf16.msra.mxu0 %v3520
    %3583 = vmatpush.bf16.msra.mxu0 %v3519
    %3584 = vmatpush.bf16.msra.mxu0 %v3518
    %3585 = vmatpush.bf16.msra.mxu0 %v3517
    %3586 = vmatpush.bf16.msra.mxu0 %v3516
    %3587 = vmatpush.bf16.msra.mxu0 %v3515
    %3588 = vmatpush.bf16.msra.mxu0 %v3514
    %3589 = vmatpush.bf16.msra.mxu0 %v3513
    %3590 = vmatmul.bf16.gmra.mxu0 %v3306
    %v3591 = vpop.f32.mrf.mxu0
    %v3592 = vadd.f32 %v3579, %v3591
    %v3593 = vpop.f32.mrf.mxu0
    %3594 = vdwg.mxu0
    %3595 = vmatpush.bf16.msra.mxu0 %v3528
    %3596 = vmatpush.bf16.msra.mxu0 %v3527
    %3597 = vmatpush.bf16.msra.mxu0 %v3526
    %3598 = vmatpush.bf16.msra.mxu0 %v3525
    %3599 = vmatpush.bf16.msra.mxu0 %v3524
    %3600 = vmatpush.bf16.msra.mxu0 %v3523
    %3601 = vmatpush.bf16.msra.mxu0 %v3522
    %3602 = vmatpush.bf16.msra.mxu0 %v3521
    %3603 = vmatmul.bf16.gmra.mxu0 %v3307
    %v3604 = vpop.f32.mrf.mxu0
    %v3605 = vadd.f32 %v3592, %v3604
    %v3606 = vpop.f32.mrf.mxu0
    %3607 = vdwg.mxu0
    %3608 = vmatpush.bf16.msra.mxu0 %v3536
    %3609 = vmatpush.bf16.msra.mxu0 %v3535
    %3610 = vmatpush.bf16.msra.mxu0 %v3534
    %3611 = vmatpush.bf16.msra.mxu0 %v3533
    %3612 = vmatpush.bf16.msra.mxu0 %v3532
    %3613 = vmatpush.bf16.msra.mxu0 %v3531
    %3614 = vmatpush.bf16.msra.mxu0 %v3530
    %3615 = vmatpush.bf16.msra.mxu0 %v3529
    %3616 = vmatmul.bf16.gmra.mxu0 %v3308
    %v3617 = vpop.f32.mrf.mxu0
    %v3618 = vadd.f32 %v3605, %v3617
    %v3619 = vpop.f32.mrf.mxu0
    %3620 = vdwg.mxu0
    %3621 = vst [vmem:[#allocation13] sm:$0xff] %v3618
    // Predicated region
    $region54: #{tpu_custom_call.1} parent=1 // pred_check
      _
    $region55: #{tpu_custom_call.1} parent=1 // pred_check_branch
      %3623 = sbr.rel (0) target = $region57
    $region56: #{tpu_custom_call.1} parent=1 // pred_region
      %3625 = vsyncadd [#allocation4], 0
      %s3627 = sshll.u32 [#allocation13], 4
      %s3628 = int_to_ptr.vmem [resolvable:$true] %s3627
      %s3629 = sshll.u32 %s7, 4
      %s3630 = int_to_ptr.hbm [resolvable:$true] %s3629
      %3632 = dma.vmem_to_hbm [thread:$0]  %s3628, 128, %s3630, [#allocation4]
    $region57: #{tpu_custom_call.1} parent=1 // pred_fallthru
      _
    // Predicated region
    $region58: #{tpu_custom_call.1} parent=1 // pred_check
      _
    $region59: #{tpu_custom_call.1} parent=1 // pred_check_branch
      %3634 = sbr.rel (0) target = $region61
    $region60: #{tpu_custom_call.1} parent=1 // pred_region
      %3636 = dma.done [#allocation4], 128
    $region61: #{tpu_custom_call.1} parent=1 // pred_fallthru
      _
    %3637 = vsyncpa [#allocation3], 1
    %3638 = vsyncpa [#allocation6], 1
    %3639 = vsyncpa [#allocation9], 1
    %3640 = vsyncpa [#allocation12], 1
    %3641 = vsyncpa [#allocation4], 1

</llo_original>
